<compile_context>
chip_gen: v6e
topology: v6e:2x2x1
jax: 0.10.0
libtpu: 0.0.40
codegen_flags: <defaults>
</compile_context>

<pallas_src>
import functools

import jax
import jax.numpy as jnp
from jax import lax
from jax.experimental import pallas as pl
from jax.experimental.pallas import tpu as pltpu


def _w_block_kernel(x_ref, w_ref, b_ref, tap_ref, lnm_ref, g_ref, be_ref,
                    o_ref, *, out_dim, num_points, seq_in, seq_out, stride,
                    eps, batch_block, use_ln_mask):
    _, C, NT_p = x_ref.shape
    O = out_dim
    NTo_p = o_ref.shape[2]

    # Grid-invariant operands: load / broadcast once, OUTSIDE the unrolled
    # batch loop (JAX does not CSE broadcast_in_dim inside the loop).
    w = w_ref[...]                                        # (2O, 3C)
    bias = jnp.broadcast_to(b_ref[...], (2 * O, NT_p))    # (2O, NT_p)
    taps = tap_ref[...]                                   # (2, NT_p)
    m_prev = jnp.broadcast_to(taps[0:1, :], (C, NT_p))    # 0 where t == 0 / pad
    m_next = jnp.broadcast_to(taps[1:2, :], (C, NT_p))    # 0 where t == T-1 / pad
    g = g_ref[...]                                        # (O, NTo_p)
    be = be_ref[...]                                      # (O, NTo_p)
    ln_mask = (jnp.broadcast_to(lnm_ref[...], (O, NTo_p))
               if use_ln_mask else None)

    inv_n = 1.0 / float(out_dim * num_points * seq_out)

    # batch_block is small & static: fully unrolled loop over the batch
    # elements held in this (fatter) grid step.
    for bi in range(batch_block):
        x = x_ref[bi]                                     # (C, NT_p)

        # (1,3) temporal taps on the flattened lane axis: XLU rolls plus
        # precomputed boundary masks (no cross-row wraparound, no pad leak).
        x_prev = pltpu.roll(x, 1, 1) * m_prev             # x[t-1]
        x_next = pltpu.roll(x, NT_p - 1, 1) * m_next      # x[t+1]

        # Both convs in ONE fused K=3C MXU matmul, f32 accumulation.
        rhs = jnp.concatenate([x_prev, x, x_next], axis=0)   # (3C, NT_p)
        y = jnp.dot(w, rhs, preferred_element_type=jnp.float32) + bias

        if stride > 1:
            # Strided conv == stride-1 conv sampled at t = k*stride; one lane
            # subsample of the small (2O, NT) result (not once per tap).
            y = y.reshape(2 * O, num_points, seq_in)[:, :, ::stride]
            y = y.reshape(2 * O, num_points * seq_out)

        z = jax.nn.sigmoid(y[:O]) * jnp.tanh(y[O:])       # (O, NTo_p)

        # Single-pass LayerNorm over the (O, N, T_out) slab (biased variance),
        # excluding padded lanes from the statistics.
        zm = z * ln_mask if use_ln_mask else z
        mean = jnp.sum(zm) * inv_n
        var = jnp.maximum(jnp.sum(zm * z) * inv_n - mean * mean, 0.0)
        o_ref[bi] = (z - mean) * lax.rsqrt(var + eps) * g + be


def _round_up(v, m):
    return (v + m - 1) // m * m


def w_block_forward(x, w1, b1, w2, b2, gamma, beta, *, stride=1, eps=1e-5,
                    batch_block=None):
    """x: (B, C, N, T) f32. w*: (O, C, 1, 3). b*: (O,). gamma/beta: (O, N, T_out).
    Returns (B, O, N, T_out), matching the PyTorch W_block forward."""
    B, C, N, T = x.shape
    O = w1.shape[0]
    T_out = (T + 2 - 3) // stride + 1
    NT, NTo = N * T, N * T_out

    # Keep the lane axis a multiple of 128 (unmasked vst). Only the stride==1
    # path is padded (there NT == NTo).
    if stride == 1:
        NT_p = _round_up(NT, 128)
        NTo_p = NT_p
    else:
        # TODO(synk): lane-pad the stride>1 path too (needs an in-kernel
        # repack after the subsample); stores fall back to masked vst there.
        NT_p, NTo_p = NT, NTo
    use_ln_mask = NTo_p != NTo

    # Batch blocking: fatter grid steps amortize per-step overhead; keep the
    # step count even (>=2) when possible so both v7x TensorCores get work.
    if batch_block is None:
        batch_block = B // 2 if (B >= 2 and B % 2 == 0) else 1
    assert B % batch_block == 0, "batch_block must divide the batch size"
    grid = (B // batch_block,)

    # Conv weights -> (O, 3C) with column index k*C + c (tap k = t-1, t, t+1);
    # both convs stacked row-wise: (2O, 3C). Bias is a separate (2O, 1) input.
    def to2d(wc):
        return jnp.transpose(wc[:, :, 0, :], (0, 2, 1)).reshape(O, 3 * C)

    w_stacked = jnp.concatenate([to2d(w1), to2d(w2)], axis=0).astype(jnp.float32)
    bias = jnp.concatenate([b1, b2], axis=0).reshape(2 * O, 1).astype(jnp.float32)

    # Precomputed, grid-invariant masks: tap-boundary masks over the (padded)
    # input lanes, validity mask over the (padded) output lanes.
    lane = jnp.arange(NT_p, dtype=jnp.int32)
    t_of = lane % T
    in_valid = lane < NT
    tap_mask = jnp.stack(
        [jnp.where(in_valid & (t_of != 0), 1.0, 0.0),
         jnp.where(in_valid & (t_of != T - 1), 1.0, 0.0)],
        axis=0).astype(jnp.float32)                                  # (2, NT_p)
    ln_mask = (jnp.arange(NTo_p, dtype=jnp.int32) < NTo
               ).astype(jnp.float32).reshape(1, NTo_p)               # (1, NTo_p)

    x_flat = x.reshape(B, C, NT).astype(jnp.float32)
    g_flat = gamma.reshape(O, NTo).astype(jnp.float32)
    be_flat = beta.reshape(O, NTo).astype(jnp.float32)
    if NT_p > NT:
        x_flat = jnp.pad(x_flat, ((0, 0), (0, 0), (0, NT_p - NT)))
    if NTo_p > NTo:
        g_flat = jnp.pad(g_flat, ((0, 0), (0, NTo_p - NTo)))
        be_flat = jnp.pad(be_flat, ((0, 0), (0, NTo_p - NTo)))

    kernel = functools.partial(
        _w_block_kernel, out_dim=O, num_points=N, seq_in=T, seq_out=T_out,
        stride=stride, eps=eps, batch_block=batch_block,
        use_ln_mask=use_ln_mask)

    def build(single_buffer):
        def inv_spec(shape):
            kwargs = {}
            if single_buffer:
                # Grid-invariant (constant index_map): never re-fetched, so a
                # single buffer is enough -> VMEM headroom on v7x.
                kwargs["pipeline_mode"] = pl.Buffered(1)
            return pl.BlockSpec(shape, lambda *_: (0,) * len(shape), **kwargs)

        return pl.pallas_call(
            kernel,
            out_shape=jax.ShapeDtypeStruct((B, O, NTo_p), jnp.float32),
            grid_spec=pltpu.PrefetchScalarGridSpec(
                num_scalar_prefetch=0,
                grid=grid,
                in_specs=[
                    pl.BlockSpec((batch_block, C, NT_p), lambda g: (g, 0, 0)),
                    inv_spec((2 * O, 3 * C)),      # stacked conv weights
                    inv_spec((2 * O, 1)),          # stacked biases
                    inv_spec((2, NT_p)),           # tap boundary masks
                    inv_spec((1, NTo_p)),          # LN valid-lane mask
                    inv_spec((O, NTo_p)),          # gamma
                    inv_spec((O, NTo_p)),          # beta
                ],
                out_specs=pl.BlockSpec((batch_block, O, NTo_p),
                                       lambda g: (g, 0, 0)),
            ),
            compiler_params=pltpu.CompilerParams(
                dimension_semantics=("parallel",)),
        )

    args = (x_flat, w_stacked, bias, tap_mask, ln_mask, g_flat, be_flat)
    try:
        out_flat = build(single_buffer=True)(*args)
    except Exception:
        # pl.Buffered / pipeline_mode not supported on this JAX version:
        # fall back to default double-buffered invariant inputs.
        out_flat = build(single_buffer=False)(*args)

    if NTo_p > NTo:
        out_flat = out_flat[:, :, :NTo]
    return out_flat.reshape(B, O, N, T_out)


def _reference(x, w1, b1, w2, b2, gamma, beta, *, stride=1, eps=1e-5):
    dn = ("NCHW", "OIHW", "NCHW")
    prec = lax.Precision.HIGHEST
    y1 = lax.conv_general_dilated(
        x, w1, window_strides=(1, stride), padding=((0, 0), (1, 1)),
        dimension_numbers=dn, precision=prec) + b1[None, :, None, None]
    y2 = lax.conv_general_dilated(
        x, w2, window_strides=(1, stride), padding=((0, 0), (1, 1)),
        dimension_numbers=dn, precision=prec) + b2[None, :, None, None]
    z = jax.nn.sigmoid(y1) * jnp.tanh(y2)
    mean = z.mean(axis=(1, 2, 3), keepdims=True)
    var = ((z - mean) ** 2).mean(axis=(1, 2, 3), keepdims=True)
    return (z - mean) / jnp.sqrt(var + eps) * gamma[None] + beta[None]


if __name__ == "__main__":
    def _run_case(B, C_in, C_out, N, T, stride, key):
        T_out = (T + 2 - 3) // stride + 1
        ks = jax.random.split(key, 7)
        x = jax.random.normal(ks[0], (B, C_in, N, T), dtype=jnp.float32)
        w1 = 0.2 * jax.random.normal(ks[1], (C_out, C_in, 1, 3), dtype=jnp.float32)
        b1 = 0.1 * jax.random.normal(ks[2], (C_out,), dtype=jnp.float32)
        w2 = 0.2 * jax.random.normal(ks[3], (C_out, C_in, 1, 3), dtype=jnp.float32)
        b2 = 0.1 * jax.random.normal(ks[4], (C_out,), dtype=jnp.float32)
        gamma = 1.0 + 0.05 * jax.random.normal(
            ks[5], (C_out, N, T_out), dtype=jnp.float32)
        beta = 0.05 * jax.random.normal(
            ks[6], (C_out, N, T_out), dtype=jnp.float32)

        out = jax.block_until_ready(
            w_block_forward(x, w1, b1, w2, b2, gamma, beta, stride=stride))
        ref = jax.block_until_ready(
            _reference(x, w1, b1, w2, b2, gamma, beta, stride=stride))
        assert out.shape == (B, C_out, N, T_out), out.shape
        assert jnp.allclose(out, ref, atol=1e-4, rtol=1e-4), \
            float(jnp.max(jnp.abs(out - ref)))

    key = jax.random.PRNGKey(0)
    k1, k2 = jax.random.split(key)
    # Lane-aligned case: N*T = 256, batch_block = 2 -> grid of 2 fat steps.
    _run_case(B=4, C_in=4, C_out=8, N=16, T=16, stride=1, key=k1)
    # Non-128-multiple lanes: N*T = 120 -> zero-padded to 128, LN stats masked.
    _run_case(B=2, C_in=4, C_out=8, N=10, T=12, stride=1, key=k2)
    print("KERNEL_OK")
</pallas_src>

<mosaic_0001>
module attributes {stable_mosaic.version = 11 : i64} {
  func.func @_w_block_kernel(%arg0: i32, %arg1: memref<2x4x256xf32, #tpu.memory_space<vmem>>, %arg2: memref<16x12xf32, #tpu.memory_space<vmem>>, %arg3: memref<16x1xf32, #tpu.memory_space<vmem>>, %arg4: memref<2x256xf32, #tpu.memory_space<vmem>>, %arg5: memref<1x256xf32, #tpu.memory_space<vmem>>, %arg6: memref<8x256xf32, #tpu.memory_space<vmem>>, %arg7: memref<8x256xf32, #tpu.memory_space<vmem>>, %arg8: memref<2x8x256xf32, #tpu.memory_space<vmem>>) attributes {dimension_semantics = [#tpu.dimension_semantics<parallel>], iteration_bounds = array<i64: 2>, scalar_prefetch = 0 : i64, scratch_operands = 0 : i64, tpu.core_type = #tpu.core_type<tc>, window_params = [{transform_indices = @transform_0, window_bounds = array<i64: 2, 4, 256>}, {pipeline_mode = #tpu.pipeline_mode<synchronous>, transform_indices = @transform_1, window_bounds = array<i64: 16, 12>}, {pipeline_mode = #tpu.pipeline_mode<synchronous>, transform_indices = @transform_2, window_bounds = array<i64: 16, 1>}, {pipeline_mode = #tpu.pipeline_mode<synchronous>, transform_indices = @transform_3, window_bounds = array<i64: 2, 256>}, {pipeline_mode = #tpu.pipeline_mode<synchronous>, transform_indices = @transform_4, window_bounds = array<i64: 1, 256>}, {pipeline_mode = #tpu.pipeline_mode<synchronous>, transform_indices = @transform_5, window_bounds = array<i64: 8, 256>}, {pipeline_mode = #tpu.pipeline_mode<synchronous>, transform_indices = @transform_6, window_bounds = array<i64: 8, 256>}, {transform_indices = @transform_7, window_bounds = array<i64: 2, 8, 256>}]} {
    %c0 = arith.constant 0 : index
    %c0_0 = arith.constant 0 : index
    %0 = vector.load %arg2[%c0, %c0_0] : memref<16x12xf32, #tpu.memory_space<vmem>>, vector<16x12xf32>
    %c0_1 = arith.constant 0 : index
    %c0_2 = arith.constant 0 : index
    %1 = vector.load %arg3[%c0_1, %c0_2] : memref<16x1xf32, #tpu.memory_space<vmem>>, vector<16x1xf32>
    %2 = vector.shape_cast %1 : vector<16x1xf32> to vector<16x1xf32>
    %3 = vector.broadcast %2 : vector<16x1xf32> to vector<16x256xf32>
    %c0_3 = arith.constant 0 : index
    %c0_4 = arith.constant 0 : index
    %4 = vector.load %arg4[%c0_3, %c0_4] : memref<2x256xf32, #tpu.memory_space<vmem>>, vector<2x256xf32>
    %5 = vector.extract_strided_slice %4 {offsets = [0, 0], sizes = [1, 256], strides = [1, 1]} : vector<2x256xf32> to vector<1x256xf32>
    %6 = vector.shape_cast %5 : vector<1x256xf32> to vector<1x256xf32>
    %7 = vector.broadcast %6 : vector<1x256xf32> to vector<4x256xf32>
    %8 = vector.extract_strided_slice %4 {offsets = [1, 0], sizes = [1, 256], strides = [1, 1]} : vector<2x256xf32> to vector<1x256xf32>
    %9 = vector.shape_cast %8 : vector<1x256xf32> to vector<1x256xf32>
    %10 = vector.broadcast %9 : vector<1x256xf32> to vector<4x256xf32>
    %c0_5 = arith.constant 0 : index
    %c0_6 = arith.constant 0 : index
    %11 = vector.load %arg6[%c0_5, %c0_6] : memref<8x256xf32, #tpu.memory_space<vmem>>, vector<8x256xf32>
    %c0_7 = arith.constant 0 : index
    %c0_8 = arith.constant 0 : index
    %12 = vector.load %arg7[%c0_7, %c0_8] : memref<8x256xf32, #tpu.memory_space<vmem>>, vector<8x256xf32>
    %c0_9 = arith.constant 0 : index
    %c0_10 = arith.constant 0 : index
    %c0_11 = arith.constant 0 : index
    %13 = vector.load %arg1[%c0_9, %c0_10, %c0_11] : memref<2x4x256xf32, #tpu.memory_space<vmem>>, vector<1x4x256xf32>
    %14 = vector.shape_cast %13 : vector<1x4x256xf32> to vector<4x256xf32>
    %c1_i32 = arith.constant 1 : i32
    %15 = tpu.dynamic_rotate %14 by %c1_i32 dim 1 : vector<4x256xf32>, i32 -> vector<4x256xf32>
    %16 = arith.mulf %15, %7 : vector<4x256xf32>
    %c255_i32 = arith.constant 255 : i32
    %17 = tpu.dynamic_rotate %14 by %c255_i32 dim 1 : vector<4x256xf32>, i32 -> vector<4x256xf32>
    %18 = arith.mulf %17, %10 : vector<4x256xf32>
    %19 = tpu.concatenate %16, %14, %18 in 0 : vector<4x256xf32>, vector<4x256xf32>, vector<4x256xf32> -> vector<12x256xf32>
    %cst = arith.constant dense<0.000000e+00> : vector<16x256xf32>
    %20 = tpu.matmul %0, %19, %cst {dimension_numbers = #tpu.dot_dimension_numbers<[1], [0], [0], [1], [0, 0, 1, 1], [], []>} : vector<16x12xf32>, vector<12x256xf32>, vector<16x256xf32> -> vector<16x256xf32>
    %21 = arith.addf %20, %3 : vector<16x256xf32>
    %22 = vector.extract_strided_slice %21 {offsets = [0, 0], sizes = [8, 256], strides = [1, 1]} : vector<16x256xf32> to vector<8x256xf32>
    %23 = arith.negf %22 : vector<8x256xf32>
    %24 = math.exp %23 : vector<8x256xf32>
    %cst_12 = arith.constant 1.000000e+00 : f32
    %25 = vector.broadcast %cst_12 : f32 to vector<8x256xf32>
    %26 = arith.addf %25, %24 : vector<8x256xf32>
    %27 = arith.divf %25, %26 : vector<8x256xf32>
    %28 = vector.extract_strided_slice %21 {offsets = [8, 0], sizes = [8, 256], strides = [1, 1]} : vector<16x256xf32> to vector<8x256xf32>
    %29 = math.tanh %28 : vector<8x256xf32>
    %30 = arith.mulf %27, %29 : vector<8x256xf32>
    %31 = vector.shape_cast %30 : vector<8x256xf32> to vector<1x8x256xf32>
    %cst_13 = arith.constant dense<0.000000e+00> : vector<1xf32>
    %32 = vector.multi_reduction <add>, %31, %cst_13 [1, 2] : vector<1x8x256xf32> to vector<1xf32>
    %33 = vector.shape_cast %32 : vector<1xf32> to vector<1x1x1xf32>
    %34 = vector.extract %33[0, 0, 0] : f32 from vector<1x1x1xf32>
    %cst_14 = arith.constant 4.8828125E-4 : f32
    %35 = arith.mulf %34, %cst_14 : f32
    %36 = arith.mulf %30, %30 : vector<8x256xf32>
    %37 = vector.shape_cast %36 : vector<8x256xf32> to vector<1x8x256xf32>
    %cst_15 = arith.constant dense<0.000000e+00> : vector<1xf32>
    %38 = vector.multi_reduction <add>, %37, %cst_15 [1, 2] : vector<1x8x256xf32> to vector<1xf32>
    %39 = vector.shape_cast %38 : vector<1xf32> to vector<1x1x1xf32>
    %40 = vector.extract %39[0, 0, 0] : f32 from vector<1x1x1xf32>
    %cst_16 = arith.constant 4.8828125E-4 : f32
    %41 = arith.mulf %40, %cst_16 : f32
    %42 = arith.mulf %35, %35 : f32
    %43 = arith.subf %41, %42 : f32
    %cst_17 = arith.constant 0.000000e+00 : f32
    %44 = arith.maximumf %43, %cst_17 : f32
    %45 = vector.broadcast %35 : f32 to vector<8x256xf32>
    %46 = arith.subf %30, %45 : vector<8x256xf32>
    %cst_18 = arith.constant 9.99999974E-6 : f32
    %47 = arith.addf %44, %cst_18 : f32
    %48 = math.rsqrt %47 : f32
    %49 = vector.broadcast %48 : f32 to vector<8x256xf32>
    %50 = arith.mulf %46, %49 : vector<8x256xf32>
    %51 = arith.mulf %50, %11 : vector<8x256xf32>
    %52 = arith.addf %51, %12 : vector<8x256xf32>
    %c0_19 = arith.constant 0 : index
    %c0_20 = arith.constant 0 : index
    %c0_21 = arith.constant 0 : index
    %53 = vector.load %arg8[%c0_19, %c0_20, %c0_21] : memref<2x8x256xf32, #tpu.memory_space<vmem>>, vector<1x8x256xf32>
    %54 = vector.shape_cast %53 : vector<1x8x256xf32> to vector<8x256xf32>
    %55 = vector.shape_cast %52 : vector<8x256xf32> to vector<1x8x256xf32>
    tpu.vector_store %arg8[%c0_19, %c0_20, %c0_21], %55 {strides = array<i32>} : memref<2x8x256xf32, #tpu.memory_space<vmem>>, vector<1x8x256xf32>,
    %c1 = arith.constant 1 : index
    %c0_22 = arith.constant 0 : index
    %c0_23 = arith.constant 0 : index
    %56 = vector.load %arg1[%c1, %c0_22, %c0_23] : memref<2x4x256xf32, #tpu.memory_space<vmem>>, vector<1x4x256xf32>
    %57 = vector.shape_cast %56 : vector<1x4x256xf32> to vector<4x256xf32>
    %c1_i32_24 = arith.constant 1 : i32
    %58 = tpu.dynamic_rotate %57 by %c1_i32_24 dim 1 : vector<4x256xf32>, i32 -> vector<4x256xf32>
    %59 = arith.mulf %58, %7 : vector<4x256xf32>
    %c255_i32_25 = arith.constant 255 : i32
    %60 = tpu.dynamic_rotate %57 by %c255_i32_25 dim 1 : vector<4x256xf32>, i32 -> vector<4x256xf32>
    %61 = arith.mulf %60, %10 : vector<4x256xf32>
    %62 = tpu.concatenate %59, %57, %61 in 0 : vector<4x256xf32>, vector<4x256xf32>, vector<4x256xf32> -> vector<12x256xf32>
    %cst_26 = arith.constant dense<0.000000e+00> : vector<16x256xf32>
    %63 = tpu.matmul %0, %62, %cst_26 {dimension_numbers = #tpu.dot_dimension_numbers<[1], [0], [0], [1], [0, 0, 1, 1], [], []>} : vector<16x12xf32>, vector<12x256xf32>, vector<16x256xf32> -> vector<16x256xf32>
    %64 = arith.addf %63, %3 : vector<16x256xf32>
    %65 = vector.extract_strided_slice %64 {offsets = [0, 0], sizes = [8, 256], strides = [1, 1]} : vector<16x256xf32> to vector<8x256xf32>
    %66 = arith.negf %65 : vector<8x256xf32>
    %67 = math.exp %66 : vector<8x256xf32>
    %cst_27 = arith.constant 1.000000e+00 : f32
    %68 = vector.broadcast %cst_27 : f32 to vector<8x256xf32>
    %69 = arith.addf %68, %67 : vector<8x256xf32>
    %70 = arith.divf %68, %69 : vector<8x256xf32>
    %71 = vector.extract_strided_slice %64 {offsets = [8, 0], sizes = [8, 256], strides = [1, 1]} : vector<16x256xf32> to vector<8x256xf32>
    %72 = math.tanh %71 : vector<8x256xf32>
    %73 = arith.mulf %70, %72 : vector<8x256xf32>
    %74 = vector.shape_cast %73 : vector<8x256xf32> to vector<1x8x256xf32>
    %cst_28 = arith.constant dense<0.000000e+00> : vector<1xf32>
    %75 = vector.multi_reduction <add>, %74, %cst_28 [1, 2] : vector<1x8x256xf32> to vector<1xf32>
    %76 = vector.shape_cast %75 : vector<1xf32> to vector<1x1x1xf32>
    %77 = vector.extract %76[0, 0, 0] : f32 from vector<1x1x1xf32>
    %cst_29 = arith.constant 4.8828125E-4 : f32
    %78 = arith.mulf %77, %cst_29 : f32
    %79 = arith.mulf %73, %73 : vector<8x256xf32>
    %80 = vector.shape_cast %79 : vector<8x256xf32> to vector<1x8x256xf32>
    %cst_30 = arith.constant dense<0.000000e+00> : vector<1xf32>
    %81 = vector.multi_reduction <add>, %80, %cst_30 [1, 2] : vector<1x8x256xf32> to vector<1xf32>
    %82 = vector.shape_cast %81 : vector<1xf32> to vector<1x1x1xf32>
    %83 = vector.extract %82[0, 0, 0] : f32 from vector<1x1x1xf32>
    %cst_31 = arith.constant 4.8828125E-4 : f32
    %84 = arith.mulf %83, %cst_31 : f32
    %85 = arith.mulf %78, %78 : f32
    %86 = arith.subf %84, %85 : f32
    %cst_32 = arith.constant 0.000000e+00 : f32
    %87 = arith.maximumf %86, %cst_32 : f32
    %88 = vector.broadcast %78 : f32 to vector<8x256xf32>
    %89 = arith.subf %73, %88 : vector<8x256xf32>
    %cst_33 = arith.constant 9.99999974E-6 : f32
    %90 = arith.addf %87, %cst_33 : f32
    %91 = math.rsqrt %90 : f32
    %92 = vector.broadcast %91 : f32 to vector<8x256xf32>
    %93 = arith.mulf %89, %92 : vector<8x256xf32>
    %94 = arith.mulf %93, %11 : vector<8x256xf32>
    %95 = arith.addf %94, %12 : vector<8x256xf32>
    %c1_34 = arith.constant 1 : index
    %c0_35 = arith.constant 0 : index
    %c0_36 = arith.constant 0 : index
    %96 = vector.load %arg8[%c1_34, %c0_35, %c0_36] : memref<2x8x256xf32, #tpu.memory_space<vmem>>, vector<1x8x256xf32>
    %97 = vector.shape_cast %96 : vector<1x8x256xf32> to vector<8x256xf32>
    %98 = vector.shape_cast %95 : vector<8x256xf32> to vector<1x8x256xf32>
    tpu.vector_store %arg8[%c1_34, %c0_35, %c0_36], %98 {strides = array<i32>} : memref<2x8x256xf32, #tpu.memory_space<vmem>>, vector<1x8x256xf32>,
    return
  }
  func.func @transform_0(%arg0: i32) -> (i32, i32, i32) {
    %c0_i32 = arith.constant 0 : i32
    %c0_i32_0 = arith.constant 0 : i32
    %c0_i32_1 = arith.constant 0 : i32
    return %arg0, %c0_i32, %c0_i32_0 : i32, i32, i32
  }
  func.func @transform_1(%arg0: i32) -> (i32, i32) {
    %c0_i32 = arith.constant 0 : i32
    %c0_i32_0 = arith.constant 0 : i32
    %c0_i32_1 = arith.constant 0 : i32
    return %c0_i32, %c0_i32_0 : i32, i32
  }
  func.func @transform_2(%arg0: i32) -> (i32, i32) {
    %c0_i32 = arith.constant 0 : i32
    %c0_i32_0 = arith.constant 0 : i32
    %c0_i32_1 = arith.constant 0 : i32
    return %c0_i32, %c0_i32_0 : i32, i32
  }
  func.func @transform_3(%arg0: i32) -> (i32, i32) {
    %c0_i32 = arith.constant 0 : i32
    %c0_i32_0 = arith.constant 0 : i32
    %c0_i32_1 = arith.constant 0 : i32
    return %c0_i32, %c0_i32_0 : i32, i32
  }
  func.func @transform_4(%arg0: i32) -> (i32, i32) {
    %c0_i32 = arith.constant 0 : i32
    %c0_i32_0 = arith.constant 0 : i32
    %c0_i32_1 = arith.constant 0 : i32
    return %c0_i32, %c0_i32_0 : i32, i32
  }
  func.func @transform_5(%arg0: i32) -> (i32, i32) {
    %c0_i32 = arith.constant 0 : i32
    %c0_i32_0 = arith.constant 0 : i32
    %c0_i32_1 = arith.constant 0 : i32
    return %c0_i32, %c0_i32_0 : i32, i32
  }
  func.func @transform_6(%arg0: i32) -> (i32, i32) {
    %c0_i32 = arith.constant 0 : i32
    %c0_i32_0 = arith.constant 0 : i32
    %c0_i32_1 = arith.constant 0 : i32
    return %c0_i32, %c0_i32_0 : i32, i32
  }
  func.func @transform_7(%arg0: i32) -> (i32, i32, i32) {
    %c0_i32 = arith.constant 0 : i32
    %c0_i32_0 = arith.constant 0 : i32
    %c0_i32_1 = arith.constant 0 : i32
    return %arg0, %c0_i32, %c0_i32_0 : i32, i32, i32
  }
}

module attributes {stable_mosaic.version = 11 : i64} {
  func.func @_w_block_kernel(%arg0: i32, %arg1: memref<2x4x256xf32, #tpu.memory_space<vmem>>, %arg2: memref<16x12xf32, #tpu.memory_space<vmem>>, %arg3: memref<16x1xf32, #tpu.memory_space<vmem>>, %arg4: memref<2x256xf32, #tpu.memory_space<vmem>>, %arg5: memref<1x256xf32, #tpu.memory_space<vmem>>, %arg6: memref<8x256xf32, #tpu.memory_space<vmem>>, %arg7: memref<8x256xf32, #tpu.memory_space<vmem>>, %arg8: memref<2x8x256xf32, #tpu.memory_space<vmem>>) attributes {dimension_semantics = [#tpu.dimension_semantics<parallel>], iteration_bounds = array<i64: 2>, scalar_prefetch = 0 : i64, scratch_operands = 0 : i64, tpu.core_type = #tpu.core_type<tc>, window_params = [{transform_indices = @transform_0, window_bounds = array<i64: 2, 4, 256>}, {pipeline_mode = #tpu.pipeline_mode<synchronous>, transform_indices = @transform_1, window_bounds = array<i64: 16, 12>}, {pipeline_mode = #tpu.pipeline_mode<synchronous>, transform_indices = @transform_2, window_bounds = array<i64: 16, 1>}, {pipeline_mode = #tpu.pipeline_mode<synchronous>, transform_indices = @transform_3, window_bounds = array<i64: 2, 256>}, {pipeline_mode = #tpu.pipeline_mode<synchronous>, transform_indices = @transform_4, window_bounds = array<i64: 1, 256>}, {pipeline_mode = #tpu.pipeline_mode<synchronous>, transform_indices = @transform_5, window_bounds = array<i64: 8, 256>}, {pipeline_mode = #tpu.pipeline_mode<synchronous>, transform_indices = @transform_6, window_bounds = array<i64: 8, 256>}, {transform_indices = @transform_7, window_bounds = array<i64: 2, 8, 256>}]} {
    %c0 = arith.constant 0 : index
    %c0_0 = arith.constant 0 : index
    %0 = vector.load %arg2[%c0, %c0_0] : memref<16x12xf32, #tpu.memory_space<vmem>>, vector<16x12xf32>
    %c0_1 = arith.constant 0 : index
    %c0_2 = arith.constant 0 : index
    %1 = vector.load %arg3[%c0_1, %c0_2] : memref<16x1xf32, #tpu.memory_space<vmem>>, vector<16x1xf32>
    %2 = vector.shape_cast %1 : vector<16x1xf32> to vector<16x1xf32>
    %3 = vector.broadcast %2 : vector<16x1xf32> to vector<16x256xf32>
    %c0_3 = arith.constant 0 : index
    %c0_4 = arith.constant 0 : index
    %4 = vector.load %arg4[%c0_3, %c0_4] : memref<2x256xf32, #tpu.memory_space<vmem>>, vector<2x256xf32>
    %5 = vector.extract_strided_slice %4 {offsets = [0, 0], sizes = [1, 256], strides = [1, 1]} : vector<2x256xf32> to vector<1x256xf32>
    %6 = vector.shape_cast %5 : vector<1x256xf32> to vector<1x256xf32>
    %7 = vector.broadcast %6 : vector<1x256xf32> to vector<4x256xf32>
    %8 = vector.extract_strided_slice %4 {offsets = [1, 0], sizes = [1, 256], strides = [1, 1]} : vector<2x256xf32> to vector<1x256xf32>
    %9 = vector.shape_cast %8 : vector<1x256xf32> to vector<1x256xf32>
    %10 = vector.broadcast %9 : vector<1x256xf32> to vector<4x256xf32>
    %c0_5 = arith.constant 0 : index
    %c0_6 = arith.constant 0 : index
    %11 = vector.load %arg6[%c0_5, %c0_6] : memref<8x256xf32, #tpu.memory_space<vmem>>, vector<8x256xf32>
    %c0_7 = arith.constant 0 : index
    %c0_8 = arith.constant 0 : index
    %12 = vector.load %arg7[%c0_7, %c0_8] : memref<8x256xf32, #tpu.memory_space<vmem>>, vector<8x256xf32>
    %c0_9 = arith.constant 0 : index
    %c0_10 = arith.constant 0 : index
    %c0_11 = arith.constant 0 : index
    %13 = vector.load %arg1[%c0_9, %c0_10, %c0_11] : memref<2x4x256xf32, #tpu.memory_space<vmem>>, vector<1x4x256xf32>
    %14 = vector.shape_cast %13 : vector<1x4x256xf32> to vector<4x256xf32>
    %c1_i32 = arith.constant 1 : i32
    %15 = tpu.dynamic_rotate %14 by %c1_i32 dim 1 : vector<4x256xf32>, i32 -> vector<4x256xf32>
    %16 = arith.mulf %15, %7 : vector<4x256xf32>
    %c255_i32 = arith.constant 255 : i32
    %17 = tpu.dynamic_rotate %14 by %c255_i32 dim 1 : vector<4x256xf32>, i32 -> vector<4x256xf32>
    %18 = arith.mulf %17, %10 : vector<4x256xf32>
    %19 = tpu.concatenate %16, %14, %18 in 0 : vector<4x256xf32>, vector<4x256xf32>, vector<4x256xf32> -> vector<12x256xf32>
    %cst = arith.constant dense<0.000000e+00> : vector<16x256xf32>
    %20 = tpu.matmul %0, %19, %cst {dimension_numbers = #tpu.dot_dimension_numbers<[1], [0], [0], [1], [0, 0, 1, 1], [], []>} : vector<16x12xf32>, vector<12x256xf32>, vector<16x256xf32> -> vector<16x256xf32>
    %21 = arith.addf %20, %3 : vector<16x256xf32>
    %22 = vector.extract_strided_slice %21 {offsets = [0, 0], sizes = [8, 256], strides = [1, 1]} : vector<16x256xf32> to vector<8x256xf32>
    %23 = arith.negf %22 : vector<8x256xf32>
    %24 = math.exp %23 : vector<8x256xf32>
    %cst_12 = arith.constant 1.000000e+00 : f32
    %25 = vector.broadcast %cst_12 : f32 to vector<8x256xf32>
    %26 = arith.addf %25, %24 : vector<8x256xf32>
    %27 = arith.divf %25, %26 : vector<8x256xf32>
    %28 = vector.extract_strided_slice %21 {offsets = [8, 0], sizes = [8, 256], strides = [1, 1]} : vector<16x256xf32> to vector<8x256xf32>
    %29 = math.tanh %28 : vector<8x256xf32>
    %30 = arith.mulf %27, %29 : vector<8x256xf32>
    %31 = vector.shape_cast %30 : vector<8x256xf32> to vector<1x8x256xf32>
    %cst_13 = arith.constant dense<0.000000e+00> : vector<1xf32>
    %32 = vector.multi_reduction <add>, %31, %cst_13 [1, 2] : vector<1x8x256xf32> to vector<1xf32>
    %33 = vector.shape_cast %32 : vector<1xf32> to vector<1x1x1xf32>
    %34 = vector.extract %33[0, 0, 0] : f32 from vector<1x1x1xf32>
    %cst_14 = arith.constant 4.8828125E-4 : f32
    %35 = arith.mulf %34, %cst_14 : f32
    %36 = arith.mulf %30, %30 : vector<8x256xf32>
    %37 = vector.shape_cast %36 : vector<8x256xf32> to vector<1x8x256xf32>
    %cst_15 = arith.constant dense<0.000000e+00> : vector<1xf32>
    %38 = vector.multi_reduction <add>, %37, %cst_15 [1, 2] : vector<1x8x256xf32> to vector<1xf32>
    %39 = vector.shape_cast %38 : vector<1xf32> to vector<1x1x1xf32>
    %40 = vector.extract %39[0, 0, 0] : f32 from vector<1x1x1xf32>
    %cst_16 = arith.constant 4.8828125E-4 : f32
    %41 = arith.mulf %40, %cst_16 : f32
    %42 = arith.mulf %35, %35 : f32
    %43 = arith.subf %41, %42 : f32
    %cst_17 = arith.constant 0.000000e+00 : f32
    %44 = arith.maximumf %43, %cst_17 : f32
    %45 = vector.broadcast %35 : f32 to vector<8x256xf32>
    %46 = arith.subf %30, %45 : vector<8x256xf32>
    %cst_18 = arith.constant 9.99999974E-6 : f32
    %47 = arith.addf %44, %cst_18 : f32
    %48 = math.rsqrt %47 : f32
    %49 = vector.broadcast %48 : f32 to vector<8x256xf32>
    %50 = arith.mulf %46, %49 : vector<8x256xf32>
    %51 = arith.mulf %50, %11 : vector<8x256xf32>
    %52 = arith.addf %51, %12 : vector<8x256xf32>
    %c0_19 = arith.constant 0 : index
    %c0_20 = arith.constant 0 : index
    %c0_21 = arith.constant 0 : index
    %53 = vector.load %arg8[%c0_19, %c0_20, %c0_21] : memref<2x8x256xf32, #tpu.memory_space<vmem>>, vector<1x8x256xf32>
    %54 = vector.shape_cast %53 : vector<1x8x256xf32> to vector<8x256xf32>
    %55 = vector.shape_cast %52 : vector<8x256xf32> to vector<1x8x256xf32>
    tpu.vector_store %arg8[%c0_19, %c0_20, %c0_21], %55 {strides = array<i32>} : memref<2x8x256xf32, #tpu.memory_space<vmem>>, vector<1x8x256xf32>,
    %c1 = arith.constant 1 : index
    %c0_22 = arith.constant 0 : index
    %c0_23 = arith.constant 0 : index
    %56 = vector.load %arg1[%c1, %c0_22, %c0_23] : memref<2x4x256xf32, #tpu.memory_space<vmem>>, vector<1x4x256xf32>
    %57 = vector.shape_cast %56 : vector<1x4x256xf32> to vector<4x256xf32>
    %c1_i32_24 = arith.constant 1 : i32
    %58 = tpu.dynamic_rotate %57 by %c1_i32_24 dim 1 : vector<4x256xf32>, i32 -> vector<4x256xf32>
    %59 = arith.mulf %58, %7 : vector<4x256xf32>
    %c255_i32_25 = arith.constant 255 : i32
    %60 = tpu.dynamic_rotate %57 by %c255_i32_25 dim 1 : vector<4x256xf32>, i32 -> vector<4x256xf32>
    %61 = arith.mulf %60, %10 : vector<4x256xf32>
    %62 = tpu.concatenate %59, %57, %61 in 0 : vector<4x256xf32>, vector<4x256xf32>, vector<4x256xf32> -> vector<12x256xf32>
    %cst_26 = arith.constant dense<0.000000e+00> : vector<16x256xf32>
    %63 = tpu.matmul %0, %62, %cst_26 {dimension_numbers = #tpu.dot_dimension_numbers<[1], [0], [0], [1], [0, 0, 1, 1], [], []>} : vector<16x12xf32>, vector<12x256xf32>, vector<16x256xf32> -> vector<16x256xf32>
    %64 = arith.addf %63, %3 : vector<16x256xf32>
    %65 = vector.extract_strided_slice %64 {offsets = [0, 0], sizes = [8, 256], strides = [1, 1]} : vector<16x256xf32> to vector<8x256xf32>
    %66 = arith.negf %65 : vector<8x256xf32>
    %67 = math.exp %66 : vector<8x256xf32>
    %cst_27 = arith.constant 1.000000e+00 : f32
    %68 = vector.broadcast %cst_27 : f32 to vector<8x256xf32>
    %69 = arith.addf %68, %67 : vector<8x256xf32>
    %70 = arith.divf %68, %69 : vector<8x256xf32>
    %71 = vector.extract_strided_slice %64 {offsets = [8, 0], sizes = [8, 256], strides = [1, 1]} : vector<16x256xf32> to vector<8x256xf32>
    %72 = math.tanh %71 : vector<8x256xf32>
    %73 = arith.mulf %70, %72 : vector<8x256xf32>
    %74 = vector.shape_cast %73 : vector<8x256xf32> to vector<1x8x256xf32>
    %cst_28 = arith.constant dense<0.000000e+00> : vector<1xf32>
    %75 = vector.multi_reduction <add>, %74, %cst_28 [1, 2] : vector<1x8x256xf32> to vector<1xf32>
    %76 = vector.shape_cast %75 : vector<1xf32> to vector<1x1x1xf32>
    %77 = vector.extract %76[0, 0, 0] : f32 from vector<1x1x1xf32>
    %cst_29 = arith.constant 4.8828125E-4 : f32
    %78 = arith.mulf %77, %cst_29 : f32
    %79 = arith.mulf %73, %73 : vector<8x256xf32>
    %80 = vector.shape_cast %79 : vector<8x256xf32> to vector<1x8x256xf32>
    %cst_30 = arith.constant dense<0.000000e+00> : vector<1xf32>
    %81 = vector.multi_reduction <add>, %80, %cst_30 [1, 2] : vector<1x8x256xf32> to vector<1xf32>
    %82 = vector.shape_cast %81 : vector<1xf32> to vector<1x1x1xf32>
    %83 = vector.extract %82[0, 0, 0] : f32 from vector<1x1x1xf32>
    %cst_31 = arith.constant 4.8828125E-4 : f32
    %84 = arith.mulf %83, %cst_31 : f32
    %85 = arith.mulf %78, %78 : f32
    %86 = arith.subf %84, %85 : f32
    %cst_32 = arith.constant 0.000000e+00 : f32
    %87 = arith.maximumf %86, %cst_32 : f32
    %88 = vector.broadcast %78 : f32 to vector<8x256xf32>
    %89 = arith.subf %73, %88 : vector<8x256xf32>
    %cst_33 = arith.constant 9.99999974E-6 : f32
    %90 = arith.addf %87, %cst_33 : f32
    %91 = math.rsqrt %90 : f32
    %92 = vector.broadcast %91 : f32 to vector<8x256xf32>
    %93 = arith.mulf %89, %92 : vector<8x256xf32>
    %94 = arith.mulf %93, %11 : vector<8x256xf32>
    %95 = arith.addf %94, %12 : vector<8x256xf32>
    %c1_34 = arith.constant 1 : index
    %c0_35 = arith.constant 0 : index
    %c0_36 = arith.constant 0 : index
    %96 = vector.load %arg8[%c1_34, %c0_35, %c0_36] : memref<2x8x256xf32, #tpu.memory_space<vmem>>, vector<1x8x256xf32>
    %97 = vector.shape_cast %96 : vector<1x8x256xf32> to vector<8x256xf32>
    %98 = vector.shape_cast %95 : vector<8x256xf32> to vector<1x8x256xf32>
    tpu.vector_store %arg8[%c1_34, %c0_35, %c0_36], %98 {strides = array<i32>} : memref<2x8x256xf32, #tpu.memory_space<vmem>>, vector<1x8x256xf32>,
    return
  }
  func.func @transform_0(%arg0: i32) -> (i32, i32, i32) {
    %c0_i32 = arith.constant 0 : i32
    %c0_i32_0 = arith.constant 0 : i32
    %c0_i32_1 = arith.constant 0 : i32
    return %arg0, %c0_i32, %c0_i32_0 : i32, i32, i32
  }
  func.func @transform_1(%arg0: i32) -> (i32, i32) {
    %c0_i32 = arith.constant 0 : i32
    %c0_i32_0 = arith.constant 0 : i32
    %c0_i32_1 = arith.constant 0 : i32
    return %c0_i32, %c0_i32_0 : i32, i32
  }
  func.func @transform_2(%arg0: i32) -> (i32, i32) {
    %c0_i32 = arith.constant 0 : i32
    %c0_i32_0 = arith.constant 0 : i32
    %c0_i32_1 = arith.constant 0 : i32
    return %c0_i32, %c0_i32_0 : i32, i32
  }
  func.func @transform_3(%arg0: i32) -> (i32, i32) {
    %c0_i32 = arith.constant 0 : i32
    %c0_i32_0 = arith.constant 0 : i32
    %c0_i32_1 = arith.constant 0 : i32
    return %c0_i32, %c0_i32_0 : i32, i32
  }
  func.func @transform_4(%arg0: i32) -> (i32, i32) {
    %c0_i32 = arith.constant 0 : i32
    %c0_i32_0 = arith.constant 0 : i32
    %c0_i32_1 = arith.constant 0 : i32
    return %c0_i32, %c0_i32_0 : i32, i32
  }
  func.func @transform_5(%arg0: i32) -> (i32, i32) {
    %c0_i32 = arith.constant 0 : i32
    %c0_i32_0 = arith.constant 0 : i32
    %c0_i32_1 = arith.constant 0 : i32
    return %c0_i32, %c0_i32_0 : i32, i32
  }
  func.func @transform_6(%arg0: i32) -> (i32, i32) {
    %c0_i32 = arith.constant 0 : i32
    %c0_i32_0 = arith.constant 0 : i32
    %c0_i32_1 = arith.constant 0 : i32
    return %c0_i32, %c0_i32_0 : i32, i32
  }
  func.func @transform_7(%arg0: i32) -> (i32, i32, i32) {
    %c0_i32 = arith.constant 0 : i32
    %c0_i32_0 = arith.constant 0 : i32
    %c0_i32_1 = arith.constant 0 : i32
    return %arg0, %c0_i32, %c0_i32_0 : i32, i32, i32
  }
}

</mosaic_0001>

<llo_original>
// kernel: tpu_custom_call.1
$region0: #{tpu_custom_call.1}
  #allocation0 [shape = 'u32[]', space=smem, size = 0x4, offset = 0x4, fixed_abs, tag = 'smem constant byte address 0x4 - core index']
  #allocation1 [shape = 'u32[144,128]{1,0:T(1,128)}', space=vmem, size = 0x12000, scoped, tag = 'internal scratch']
  %s0 = inlined_call_operand.hbm [shape: f32[4,4,256], index: 0, kind: input, shape index: {}]
  %s1 = inlined_call_operand.vmem [shape: f32[16,12], index: 1, kind: input, shape index: {}]
  %s2 = inlined_call_operand.vmem [shape: f32[16,1], index: 2, kind: input, shape index: {}]
  %s3 = inlined_call_operand.vmem [shape: f32[2,256], index: 3, kind: input, shape index: {}]
  %s4 = inlined_call_operand.vmem [shape: f32[1,256], index: 4, kind: input, shape index: {}]
  %s5 = inlined_call_operand.hbm [shape: f32[8,256], index: 5, kind: input, shape index: {}]
  %s6 = inlined_call_operand.hbm [shape: f32[8,256], index: 6, kind: input, shape index: {}]
  %s7 = inlined_call_operand.hbm [shape: f32[4,8,256], index: 7, kind: output, shape index: {}]
  %s8 = sld [smem:[#allocation0]]
  $region73: #{tpu_custom_call.1} parent=0
    _
  %s10 = ssub.s32 1, %s8
  %s11 = scalar_select 0, %s10, %s8
  $region1: #{tpu_custom_call.1} parent=0
    #allocation2 [shape = 'u8[16384]{0}', space=vmem, size = 0x4000, scoped, tag = 'input window, operand 0']
    #allocation3 [shape = 's32[2]{0}', space=sflag, size = 0x8, scoped, tag = 'scoped memory for tpu_custom_call.1']
    #allocation4 [shape = 's32[2]{0}', space=sflag, size = 0x8, scoped, tag = 'scoped memory for tpu_custom_call.1']
    #allocation5 [shape = 'u8[8192]{0}', space=vmem, size = 0x2000, scoped, tag = 'input window, operand 5, single buffered']
    #allocation6 [shape = 's32[1]{0}', space=sflag, size = 0x4, scoped, tag = 'scoped memory for tpu_custom_call.1']
    #allocation7 [shape = 'u8[8192]{0}', space=vmem, size = 0x2000, scoped, tag = 'input window, operand 6, single buffered']
    #allocation8 [shape = 'u8[32768]{0}', space=vmem, size = 0x8000, scoped, tag = 'output window, operand 0']
    %12 = vsyncpa [#allocation3], 0
    %s13 = scalar_lea.sflag [#allocation3], 1
    %14 = vsyncpa %s13, 0
    %15 = vsyncpa [#allocation6], 0
    %16 = vsyncpa [#allocation4], 0
    %s17 = scalar_lea.sflag [#allocation4], 1
    %18 = vsyncpa %s17, 0
    loop: start=0, step=1, limit=4
    $region2: #{tpu_custom_call.1} parent=1 // loop_pre_header
      _
    $region3: #{tpu_custom_call.1} parent=1 // loop_header
      %s20 = sphi 0, %s24
      %p21 = scmp.ge.s32.totalorder %s20, 4
      %s30 = sphi 0, %s32
      %s33 = sphi 0, %s30
      %s34 = sphi 0, %s33
      %s50 = sphi 0, %s34
      %s54 = sphi 0, %s54
      %s56 = sphi 0, %s54
      %s57 = sphi 0, %s56
      %s71 = sphi 0, %s57
      %s75 = sphi 0, %s75
      %s77 = sphi 0, %s75
      %s78 = sphi 0, %s77
      %s92 = sphi 0, %s78
      %s96 = sphi 0, %s96
      %s98 = sphi 0, %s96
      %s99 = sphi 0, %s98
      %s113 = sphi 0, %s99
      %s117 = sphi 0, %s117
      %s119 = sphi 0, %s117
      %s120 = sphi 0, %s119
      %s134 = sphi 0, %s120
      %s138 = sphi 0, %s138
      %s140 = sphi 0, %s138
      %s141 = sphi 0, %s140
      %s155 = sphi 0, %s141
      %s159 = sphi 0, %s159
      %s161 = sphi 0, %s159
      %s162 = sphi 0, %s161
      %s176 = sphi 0, %s162
      %s182 = sphi 0, %s184
      %s185 = sphi 0, %s182
      %s186 = sphi 0, %s185
      %s202 = sphi 0, %s186
    $region4: #{tpu_custom_call.1} parent=1 // loop_header_branch
      %23 = sbr.rel (%p21) target = $region8
    $region5: #{tpu_custom_call.1} parent=1 // loop_body
      %s25 = ssub.s32 %s20, 1
      %s26 = ssub.s32 %s20, 2
      %s27 = sadd.s32 %s20, 1
      %s28 = ssub.s32 %s20, %s27
      %p29 = scmp.eq.s32.totalorder %s28, 0
      %s31 = sadd.s32 %s30, 1
      %s32 = scalar_select %p29, %s30, %s31
      %p35 = pneg %p29
      %p36 = scmp.eq.s32.totalorder %s20, 1
      %p37 = por %p35, %p36
      %p38 = scmp.ne.s32.totalorder %s30, %s33
      %p39 = scmp.eq.s32.totalorder %s20, 0
      %p40 = por %p38, %p39
      %p41 = scmp.ne.s32.totalorder %s30, %s33
      %p42 = scmp.eq.s32.totalorder %s25, 1
      %p43 = por %p41, %p42
      %p44 = scmp.ne.s32.totalorder %s33, %s34
      %p45 = scmp.eq.s32.totalorder %s25, 0
      %p46 = por %p44, %p45
      %p47 = scmp.ne.s32.totalorder %s33, %s34
      %p48 = scmp.eq.s32.totalorder %s26, 1
      %p49 = por %p47, %p48
      %p51 = scmp.ne.s32.totalorder %s34, %s50
      %p52 = scmp.eq.s32.totalorder %s26, 0
      %p53 = por %p51, %p52
      %s55 = sadd.s32 %s54, 1
      %p58 = scmp.eq.s32.totalorder %s20, 1
      %p59 = scmp.ne.s32.totalorder %s54, %s56
      %p60 = scmp.eq.s32.totalorder %s20, 0
      %p61 = por %p59, %p60
      %p62 = scmp.ne.s32.totalorder %s54, %s56
      %p63 = scmp.eq.s32.totalorder %s25, 1
      %p64 = por %p62, %p63
      %p65 = scmp.ne.s32.totalorder %s56, %s57
      %p66 = scmp.eq.s32.totalorder %s25, 0
      %p67 = por %p65, %p66
      %p68 = scmp.ne.s32.totalorder %s56, %s57
      %p69 = scmp.eq.s32.totalorder %s26, 1
      %p70 = por %p68, %p69
      %p72 = scmp.ne.s32.totalorder %s57, %s71
      %p73 = scmp.eq.s32.totalorder %s26, 0
      %p74 = por %p72, %p73
      %s76 = sadd.s32 %s75, 1
      %p79 = scmp.eq.s32.totalorder %s20, 1
      %p80 = scmp.ne.s32.totalorder %s75, %s77
      %p81 = scmp.eq.s32.totalorder %s20, 0
      %p82 = por %p80, %p81
      %p83 = scmp.ne.s32.totalorder %s75, %s77
      %p84 = scmp.eq.s32.totalorder %s25, 1
      %p85 = por %p83, %p84
      %p86 = scmp.ne.s32.totalorder %s77, %s78
      %p87 = scmp.eq.s32.totalorder %s25, 0
      %p88 = por %p86, %p87
      %p89 = scmp.ne.s32.totalorder %s77, %s78
      %p90 = scmp.eq.s32.totalorder %s26, 1
      %p91 = por %p89, %p90
      %p93 = scmp.ne.s32.totalorder %s78, %s92
      %p94 = scmp.eq.s32.totalorder %s26, 0
      %p95 = por %p93, %p94
      %s97 = sadd.s32 %s96, 1
      %p100 = scmp.eq.s32.totalorder %s20, 1
      %p101 = scmp.ne.s32.totalorder %s96, %s98
      %p102 = scmp.eq.s32.totalorder %s20, 0
      %p103 = por %p101, %p102
      %p104 = scmp.ne.s32.totalorder %s96, %s98
      %p105 = scmp.eq.s32.totalorder %s25, 1
      %p106 = por %p104, %p105
      %p107 = scmp.ne.s32.totalorder %s98, %s99
      %p108 = scmp.eq.s32.totalorder %s25, 0
      %p109 = por %p107, %p108
      %p110 = scmp.ne.s32.totalorder %s98, %s99
      %p111 = scmp.eq.s32.totalorder %s26, 1
      %p112 = por %p110, %p111
      %p114 = scmp.ne.s32.totalorder %s99, %s113
      %p115 = scmp.eq.s32.totalorder %s26, 0
      %p116 = por %p114, %p115
      %s118 = sadd.s32 %s117, 1
      %p121 = scmp.eq.s32.totalorder %s20, 1
      %p122 = scmp.ne.s32.totalorder %s117, %s119
      %p123 = scmp.eq.s32.totalorder %s20, 0
      %p124 = por %p122, %p123
      %p125 = scmp.ne.s32.totalorder %s117, %s119
      %p126 = scmp.eq.s32.totalorder %s25, 1
      %p127 = por %p125, %p126
      %p128 = scmp.ne.s32.totalorder %s119, %s120
      %p129 = scmp.eq.s32.totalorder %s25, 0
      %p130 = por %p128, %p129
      %p131 = scmp.ne.s32.totalorder %s119, %s120
      %p132 = scmp.eq.s32.totalorder %s26, 1
      %p133 = por %p131, %p132
      %p135 = scmp.ne.s32.totalorder %s120, %s134
      %p136 = scmp.eq.s32.totalorder %s26, 0
      %p137 = por %p135, %p136
      %s139 = sadd.s32 %s138, 1
      %p142 = scmp.eq.s32.totalorder %s20, 1
      %p143 = scmp.ne.s32.totalorder %s138, %s140
      %p144 = scmp.eq.s32.totalorder %s20, 0
      %p145 = por %p143, %p144
      %p146 = scmp.ne.s32.totalorder %s138, %s140
      %p147 = scmp.eq.s32.totalorder %s25, 1
      %p148 = por %p146, %p147
      %p149 = scmp.ne.s32.totalorder %s140, %s141
      %p150 = scmp.eq.s32.totalorder %s25, 0
      %p151 = por %p149, %p150
      %p152 = scmp.ne.s32.totalorder %s140, %s141
      %p153 = scmp.eq.s32.totalorder %s26, 1
      %p154 = por %p152, %p153
      %p156 = scmp.ne.s32.totalorder %s141, %s155
      %p157 = scmp.eq.s32.totalorder %s26, 0
      %p158 = por %p156, %p157
      %s160 = sadd.s32 %s159, 1
      %p163 = scmp.eq.s32.totalorder %s20, 1
      %p164 = scmp.ne.s32.totalorder %s159, %s161
      %p165 = scmp.eq.s32.totalorder %s20, 0
      %p166 = por %p164, %p165
      %p167 = scmp.ne.s32.totalorder %s159, %s161
      %p168 = scmp.eq.s32.totalorder %s25, 1
      %p169 = por %p167, %p168
      %p170 = scmp.ne.s32.totalorder %s161, %s162
      %p171 = scmp.eq.s32.totalorder %s25, 0
      %p172 = por %p170, %p171
      %p173 = scmp.ne.s32.totalorder %s161, %s162
      %p174 = scmp.eq.s32.totalorder %s26, 1
      %p175 = por %p173, %p174
      %p177 = scmp.ne.s32.totalorder %s162, %s176
      %p178 = scmp.eq.s32.totalorder %s26, 0
      %p179 = por %p177, %p178
      %s180 = ssub.s32 %s20, %s27
      %p181 = scmp.eq.s32.totalorder %s180, 0
      %s183 = sadd.s32 %s182, 1
      %s184 = scalar_select %p181, %s182, %s183
      %p187 = pneg %p181
      %p188 = scmp.eq.s32.totalorder %s20, 1
      %p189 = por %p187, %p188
      %p190 = scmp.ne.s32.totalorder %s182, %s185
      %p191 = scmp.eq.s32.totalorder %s20, 0
      %p192 = por %p190, %p191
      %p193 = scmp.ne.s32.totalorder %s182, %s185
      %p194 = scmp.eq.s32.totalorder %s25, 1
      %p195 = por %p193, %p194
      %p196 = scmp.ne.s32.totalorder %s185, %s186
      %p197 = scmp.eq.s32.totalorder %s25, 0
      %p198 = por %p196, %p197
      %p199 = scmp.ne.s32.totalorder %s185, %s186
      %p200 = scmp.eq.s32.totalorder %s26, 1
      %p201 = por %p199, %p200
      %p203 = scmp.ne.s32.totalorder %s186, %s202
      %p204 = scmp.eq.s32.totalorder %s26, 0
      %p205 = por %p203, %p204
      %p206 = scmp.le.s32.totalorder 1, %s20
      %p207 = scmp.lt.s32.totalorder %s20, 3
      %p208 = pnand %p206, %p207
      %p209 = pneg %p208
      // Predicated region
      $region9: #{tpu_custom_call.1} parent=5 // pred_check
        _
      $region10: #{tpu_custom_call.1} parent=5 // pred_check_branch
        %211 = sbr.rel (%p208) target = $region12
      $region11: #{tpu_custom_call.1} parent=5 // pred_region
        %s212 = ssub.s32 %s20, 1
        // Predicated region
        $region13: #{tpu_custom_call.1} parent=11 // pred_check
          %p213 = pneg %p67
        $region14: #{tpu_custom_call.1} parent=11 // pred_check_branch
          %215 = sbr.rel (%p213) target = $region16
        $region15: #{tpu_custom_call.1} parent=11 // pred_region
          _
        $region16: #{tpu_custom_call.1} parent=11 // pred_fallthru
          _
        // Predicated region
        $region17: #{tpu_custom_call.1} parent=11 // pred_check
          %p216 = pneg %p88
        $region18: #{tpu_custom_call.1} parent=11 // pred_check_branch
          %218 = sbr.rel (%p216) target = $region20
        $region19: #{tpu_custom_call.1} parent=11 // pred_region
          _
        $region20: #{tpu_custom_call.1} parent=11 // pred_fallthru
          _
        // Predicated region
        $region21: #{tpu_custom_call.1} parent=11 // pred_check
          %p219 = pneg %p109
        $region22: #{tpu_custom_call.1} parent=11 // pred_check_branch
          %221 = sbr.rel (%p219) target = $region24
        $region23: #{tpu_custom_call.1} parent=11 // pred_region
          _
        $region24: #{tpu_custom_call.1} parent=11 // pred_fallthru
          _
        // Predicated region
        $region25: #{tpu_custom_call.1} parent=11 // pred_check
          %p222 = pneg %p130
        $region26: #{tpu_custom_call.1} parent=11 // pred_check_branch
          %224 = sbr.rel (%p222) target = $region28
        $region27: #{tpu_custom_call.1} parent=11 // pred_region
          _
        $region28: #{tpu_custom_call.1} parent=11 // pred_fallthru
          _
        // Predicated region
        $region29: #{tpu_custom_call.1} parent=11 // pred_check
          %p225 = pneg %p151
        $region30: #{tpu_custom_call.1} parent=11 // pred_check_branch
          %227 = sbr.rel (%p225) target = $region32
        $region31: #{tpu_custom_call.1} parent=11 // pred_region
          %s229 = ssub.s32 256, 256
          %230 = vsyncadd [#allocation6], %s229
          %s232 = sshll.u32 [#allocation5], 4
          %s233 = int_to_ptr.vmem [resolvable:$true] %s232
          %235 = dma.hbm_to_vmem [thread:$0]  %s5, 256, %s233, [#allocation6]
        $region32: #{tpu_custom_call.1} parent=11 // pred_fallthru
          _
        // Predicated region
        $region33: #{tpu_custom_call.1} parent=11 // pred_check
          %p236 = pneg %p172
        $region34: #{tpu_custom_call.1} parent=11 // pred_check_branch
          %238 = sbr.rel (%p236) target = $region36
        $region35: #{tpu_custom_call.1} parent=11 // pred_region
          %s240 = ssub.s32 256, 256
          %241 = vsyncadd [#allocation6], %s240
          %s243 = sshll.u32 [#allocation7], 4
          %s244 = int_to_ptr.vmem [resolvable:$true] %s243
          %246 = dma.hbm_to_vmem [thread:$0]  %s6, 256, %s244, [#allocation6]
        $region36: #{tpu_custom_call.1} parent=11 // pred_fallthru
          _
      $region12: #{tpu_custom_call.1} parent=5 // pred_fallthru
        _
      %p247 = scmp.lt.s32.totalorder %s20, 2
      // Predicated region
      $region37: #{tpu_custom_call.1} parent=5 // pred_check
        %p248 = pneg %p247
      $region38: #{tpu_custom_call.1} parent=5 // pred_check_branch
        %250 = sbr.rel (%p248) target = $region40
      $region39: #{tpu_custom_call.1} parent=5 // pred_region
        // Predicated region
        $region41: #{tpu_custom_call.1} parent=39 // pred_check
          %p251 = pneg %p40
        $region42: #{tpu_custom_call.1} parent=39 // pred_check_branch
          %253 = sbr.rel (%p251) target = $region44
        $region43: #{tpu_custom_call.1} parent=39 // pred_region
          %s254 = sand.u32 %s30, 1
          %s255 = scalar_lea.sflag [#allocation3], %s254
          %s256 = sand.u32 %s30, 1
          %s257 = smul.addr %s256, 16
          %s258 = scalar_lea.vmem [#allocation2], %s257
          %s259 = smul.u32 2, %s20
          %s261 = ssub.s32 256, 256
          %262 = vsyncadd %s255, %s261
          %s263 = smul.addr %s259, 2
          %s264 = smul.addr %s263, 64
          %s265 = scalar_lea.hbm %s0, %s264
          %s266 = sshll.u32 %s258, 4
          %s267 = int_to_ptr.vmem [resolvable:$true] %s266
          %272 = dma.hbm_to_vmem [thread:$0]  %s265, 256, %s267, %s255, 128, 128, 8
        $region44: #{tpu_custom_call.1} parent=39 // pred_fallthru
          _
      $region40: #{tpu_custom_call.1} parent=5 // pred_fallthru
        _
      %p273 = scmp.le.s32.totalorder 1, %s20
      %p274 = scmp.lt.s32.totalorder %s20, 3
      %p275 = pnand %p273, %p274
      %p276 = pneg %p275
      // Predicated region
      $region45: #{tpu_custom_call.1} parent=5 // pred_check
        _
      $region46: #{tpu_custom_call.1} parent=5 // pred_check_branch
        %278 = sbr.rel (%p275) target = $region48
      $region47: #{tpu_custom_call.1} parent=5 // pred_region
        %s279 = ssub.s32 %s20, 1
        %s280 = sand.u32 %s33, 1
        %s281 = scalar_lea.sflag [#allocation3], %s280
        %s282 = sand.u32 %s33, 1
        %s283 = smul.addr %s282, 16
        %s284 = scalar_lea.vmem [#allocation2], %s283
        // Predicated region
        $region49: #{tpu_custom_call.1} parent=47 // pred_check
          %p285 = pneg %p46
        $region50: #{tpu_custom_call.1} parent=47 // pred_check_branch
          %287 = sbr.rel (%p285) target = $region52
        $region51: #{tpu_custom_call.1} parent=47 // pred_region
          %288 = dma.done %s281, 256
        $region52: #{tpu_custom_call.1} parent=47 // pred_fallthru
          _
        // Predicated region
        $region53: #{tpu_custom_call.1} parent=47 // pred_check
          %p289 = pneg %p151
        $region54: #{tpu_custom_call.1} parent=47 // pred_check_branch
          %291 = sbr.rel (%p289) target = $region56
        $region55: #{tpu_custom_call.1} parent=47 // pred_region
          %292 = dma.done [#allocation6], 256
        $region56: #{tpu_custom_call.1} parent=47 // pred_fallthru
          _
        // Predicated region
        $region57: #{tpu_custom_call.1} parent=47 // pred_check
          %p293 = pneg %p172
        $region58: #{tpu_custom_call.1} parent=47 // pred_check_branch
          %295 = sbr.rel (%p293) target = $region60
        $region59: #{tpu_custom_call.1} parent=47 // pred_region
          %296 = dma.done [#allocation6], 256
        $region60: #{tpu_custom_call.1} parent=47 // pred_fallthru
          _
        %s297 = sand.u32 %s33, 1
        %s298 = scalar_lea.sflag [#allocation3], %s297
        %s299 = sand.u32 %s33, 1
        %s300 = smul.addr %s299, 16
        %s301 = scalar_lea.vmem [#allocation2], %s300
        %p302 = pneg %p46
        %p303 = pneg %p43
        %p304 = pneg %p67
        %p305 = pneg %p64
        %p306 = pneg %p88
        %p307 = pneg %p85
        %p308 = pneg %p109
        %p309 = pneg %p106
        %p310 = pneg %p130
        %p311 = pneg %p127
        %p312 = pneg %p151
        %p313 = pneg %p148
        %p314 = pneg %p172
        %p315 = pneg %p169
        %p316 = pneg %p198
        %p317 = pneg %p195
        %s318 = sand.u32 %s185, 1
        %s319 = scalar_lea.sflag [#allocation4], %s318
        %s320 = sand.u32 %s185, 1
        %s321 = smul.addr %s320, 32
        %s322 = scalar_lea.vmem [#allocation8], %s321
        %s323 = smul.u32 2, %s25
        %s324 = smul.u32 2, %s25
        %v325 = vld [vmem:[%s1] sm:$0xff]
        %v326 = vld [vmem:[%s1 + $0x8] sm:$0xff]
        %v327 = vld [vmem:[%s2] sm:$0xff]
        %v328 = vld [vmem:[%s2 + $0x8] sm:$0xff]
        %330 = vset.pattern.permute.xlu0 0
        %331 = vperm.xlu0 %330, %v327
        %v332 = vpop.permute.xlu0 %331
        %335 = vset.pattern.permute.xlu0 0
        %336 = vperm.xlu0 %335, %v328
        %v337 = vpop.permute.xlu0 %336
        %v339 = vld [vmem:[%s3] sm:$0xf]
        %v341 = vlaneseq
        %v342 = vshrl.u32 %v341, 7
        %v343 = vsub.s32 0, %v342
        %v344 = vrot.slane %v339, %v343
        %v345 = vlaneseq
        %v346 = vshrl.u32 %v345, 7
        %v347 = vsub.s32 2, %v346
        %v348 = vrot.slane %v339, %v347
        %v351 = vlaneseq
        %v352 = vshrl.u32 %v351, 7
        %v353 = vsub.s32 0, %v352
        %v354 = vrot.slane %v344, %v353
        %v355 = vlaneseq
        %v356 = vshrl.u32 %v355, 7
        %v357 = vsub.s32 0, %v356
        %v358 = vrot.slane %v348, %v357
        %v359 = vlaneseq
        %v360 = vshrl.u32 %v359, 7
        %v361 = vsub.s32 1, %v360
        %v362 = vrot.slane %v339, %v361
        %v363 = vlaneseq
        %v364 = vshrl.u32 %v363, 7
        %v365 = vsub.s32 3, %v364
        %v366 = vrot.slane %v339, %v365
        %v369 = vlaneseq
        %v370 = vshrl.u32 %v369, 7
        %v371 = vsub.s32 1, %v370
        %v372 = vrot.slane %v362, %v371
        %v373 = vlaneseq
        %v374 = vshrl.u32 %v373, 7
        %v375 = vsub.s32 1, %v374
        %v376 = vrot.slane %v366, %v375
        %v377 = vld [vmem:[#allocation5] sm:$0xff]
        %v378 = vld [vmem:[#allocation5 + $0x8] sm:$0xff]
        %v379 = vld [vmem:[#allocation7] sm:$0xff]
        %v380 = vld [vmem:[#allocation7 + $0x8] sm:$0xff]
        %v381 = vld [vmem:[%s284] sm:$0xff]
        %v383 = vcombine.high %v381, %v381
        %385 = vrot.lane.b32.xlu0 %v381, 1
        %v386 = vpop.permute.xlu0 %385
        %387 = vrot.lane.b32.xlu0 %v383, 1
        %v388 = vpop.permute.xlu0 %387
        %v389 = vlaneseq
        %v390 = vand.u32 %v389, 127
        %vm391 = vcmp.lt.s32.totalorder %v390, 1
        %v392 = vsel %vm391, %v386, %v388
        %v393 = vsel %vm391, %v388, %v386
        %v394 = vmul.f32 %v393, %v354
        %v395 = vmul.f32 %v392, %v358
        %396 = vrot.lane.b32.xlu0 %v381, 127
        %v397 = vpop.permute.xlu0 %396
        %398 = vrot.lane.b32.xlu0 %v383, 127
        %v399 = vpop.permute.xlu0 %398
        %vm400 = vcmp.lt.s32.totalorder %v390, 127
        %v401 = vsel %vm400, %v397, %v399
        %v402 = vsel %vm400, %v399, %v397
        %v403 = vmul.f32 %v401, %v372
        %v404 = vmul.f32 %v402, %v376
        %v405 = vcombine.low %v381, %v381
        %vm407 = vcmask 1043456
        %v408 = vsel %vm407, %v394, %v405
        %v409 = vsel %vm407, %v395, %v381
        %vm410 = vcmask 97280
        %v412 = vsel %vm410, %v325, 0
        %v415 = vsel %vm410, %v326, 0
        %v418 = vsel %vm407, %v403, 0
        %v421 = vsel %vm407, %v404, 0
        %423 = vmatprep.subr.mxu0 0.0
        %424 = vmatpush1.msra.mxu0 0.0
        %425 = vmatprep.subr.mxu0 0.0
        %426 = vmatpush1.msra.mxu0 0.0
        %427 = vmatprep.subr.mxu0 0.0
        %428 = vmatpush1.msra.mxu0 0.0
        %429 = vmatprep.subr.mxu0 0.0
        %430 = vmatpush1.msra.mxu0 0.0
        %431 = vmatprep.subr.mxu0 0.0
        %432 = vmatpush1.msra.mxu0 0.0
        %433 = vmatprep.subr.mxu0 0.0
        %434 = vmatpush1.msra.mxu0 0.0
        %435 = vmatprep.subr.mxu0 0.0
        %436 = vmatpush1.msra.mxu0 0.0
        %437 = vmatprep.subr.mxu0 0.0
        %438 = vmatpush1.msra.mxu0 0.0
        %439 = vmatprep.subr.mxu0 0.0
        %440 = vmatpush1.msra.mxu0 0.0
        %441 = vmatprep.subr.mxu0 0.0
        %442 = vmatpush1.msra.mxu0 0.0
        %443 = vmatprep.subr.mxu0 0.0
        %444 = vmatpush1.msra.mxu0 0.0
        %445 = vmatprep.subr.mxu0 0.0
        %446 = vmatpush1.msra.mxu0 0.0
        %447 = vmatprep.subr.mxu0 0.0
        %448 = vmatpush1.msra.mxu0 0.0
        %449 = vmatprep.subr.mxu0 0.0
        %450 = vmatpush1.msra.mxu0 0.0
        %451 = vmatprep.subr.mxu0 %v421
        %452 = vmatpush1.msra.mxu0 %v418
        %453 = vmatprep.subr.mxu0 %v409
        %454 = vmatpush1.msra.mxu0 %v408
        %455 = vmatprep.subr.mxu0 0.0
        %456 = vmatpush2.msra.mxu0 0.0
        %457 = vmatprep.subr.mxu0 0.0
        %458 = vmatpush2.msra.mxu0 0.0
        %459 = vmatprep.subr.mxu0 0.0
        %460 = vmatpush2.msra.mxu0 0.0
        %461 = vmatprep.subr.mxu0 0.0
        %462 = vmatpush2.msra.mxu0 0.0
        %463 = vmatprep.subr.mxu0 0.0
        %464 = vmatpush2.msra.mxu0 0.0
        %465 = vmatprep.subr.mxu0 0.0
        %466 = vmatpush2.msra.mxu0 0.0
        %467 = vmatprep.subr.mxu0 0.0
        %468 = vmatpush2.msra.mxu0 0.0
        %469 = vmatprep.subr.mxu0 0.0
        %470 = vmatpush2.msra.mxu0 0.0
        %471 = vmatprep.subr.mxu0 0.0
        %472 = vmatpush2.msra.mxu0 0.0
        %473 = vmatprep.subr.mxu0 0.0
        %474 = vmatpush2.msra.mxu0 0.0
        %475 = vmatprep.subr.mxu0 0.0
        %476 = vmatpush2.msra.mxu0 0.0
        %477 = vmatprep.subr.mxu0 0.0
        %478 = vmatpush2.msra.mxu0 0.0
        %479 = vmatprep.subr.mxu0 0.0
        %480 = vmatpush2.msra.mxu0 0.0
        %481 = vmatprep.subr.mxu0 0.0
        %482 = vmatpush2.msra.mxu0 0.0
        %483 = vmatprep.subr.mxu0 0.0
        %484 = vmatpush2.msra.mxu0 0.0
        %485 = vmatprep.subr.mxu0 0.0
        %486 = vmatpush2.msra.mxu0 0.0
        %487 = vmatprep.mubr.f32.mxu0 0.0
        %488 = vmatmul.mubr.f32.gmra.mxu0 %v412
        %v489 = vpop.f32.mrf.mxu0
        %v490 = vadd.f32 %v332, %v489
        %v491 = vpop.f32.mrf.mxu0
        %v492 = vadd.f32 %v332, %v491
        %493 = vmatprep.mubr.f32.mxu0 0.0
        %494 = vmatmul.mubr.f32.gmra.mxu0 %v415
        %v495 = vpop.f32.mrf.mxu0
        %v496 = vadd.f32 %v337, %v495
        %v497 = vpop.f32.mrf.mxu0
        %v498 = vadd.f32 %v337, %v497
        %499 = vdwg.mxu0
        %v500 = vxor.u32 %v490, 2147483648
        %v501 = vxor.u32 %v492, 2147483648
        %v502 = vmul.f32 %v500, 1.442695
        %v503 = vpow.pop %v502
        %v504 = vmul.f32 %v501, 1.442695
        %v505 = vpow.pop %v504
        %v506 = vadd.f32 %v503, 1.0
        %v507 = vadd.f32 %v505, 1.0
        %v508 = vrcp.pop %v506
        %v509 = vmul.f32 1.0, %v508
        %v510 = vrcp.pop %v507
        %v511 = vmul.f32 1.0, %v510
        %v512 = vtanh.pop %v496
        %v513 = vtanh.pop %v498
        %v514 = vmul.f32 %v509, %v512
        %v515 = vmul.f32 %v511, %v513
        %v516 = vadd.f32 %v514, %v515
        %517 = vadd.xlane.f32.xlu0 %v516
        %v518 = vpop.xlane.xlu0 %517
        %v519 = vrot.slane %v518, 4
        %v520 = vadd.f32 %v518, %v519
        %v521 = vrot.slane %v520, 2
        %v522 = vadd.f32 %v520, %v521
        %v523 = vrot.slane %v522, 1
        %v524 = vadd.f32 %v522, %v523
        %s525 = vtos %v524
        %s526 = smul.f32 %s525, 0.00048828125
        %v527 = vmul.f32 %v514, %v514
        %v528 = vmul.f32 %v515, %v515
        %v529 = vadd.f32 %v527, %v528
        %530 = vadd.xlane.f32.xlu0 %v529
        %v531 = vpop.xlane.xlu0 %530
        %v532 = vrot.slane %v531, 4
        %v533 = vadd.f32 %v531, %v532
        %v534 = vrot.slane %v533, 2
        %v535 = vadd.f32 %v533, %v534
        %v536 = vrot.slane %v535, 1
        %v537 = vadd.f32 %v535, %v536
        %s538 = vtos %v537
        %s539 = smul.f32 %s538, 0.00048828125
        %s540 = smul.f32 %s526, %s526
        %s541 = ssub.f32 %s539, %s540
        %s542 = smax.f32 %s541, 0.0
        %v543 = vstv %s526
        %v544 = vsub.f32 %v514, %v543
        %v545 = vsub.f32 %v515, %v543
        %s546 = sadd.f32 %s542, 1e-05
        %v547 = vstv %s546
        %v548 = vrsqrt.pop %v547
        %s549 = vtos %v548
        %v550 = vstv %s549
        %v551 = vmul.f32 %v544, %v550
        %v552 = vmul.f32 %v545, %v550
        %v553 = vmul.f32 %v551, %v377
        %v554 = vmul.f32 %v552, %v378
        %v555 = vadd.f32 %v553, %v379
        %v556 = vadd.f32 %v554, %v380
        %557 = vst [vmem:[%s322] sm:$0xff] %v555
        %558 = vst [vmem:[%s322 + $0x8] sm:$0xff] %v556
        %s559 = scalar_lea.vmem %s284, 8 [#allocation2]
        %v560 = vld [vmem:[%s559] sm:$0xff]
        %v562 = vcombine.high %v560, %v560
        %564 = vrot.lane.b32.xlu0 %v560, 1
        %v565 = vpop.permute.xlu0 %564
        %566 = vrot.lane.b32.xlu0 %v562, 1
        %v567 = vpop.permute.xlu0 %566
        %v568 = vsel %vm391, %v565, %v567
        %v569 = vsel %vm391, %v567, %v565
        %v570 = vmul.f32 %v569, %v354
        %v571 = vmul.f32 %v568, %v358
        %572 = vrot.lane.b32.xlu0 %v560, 127
        %v573 = vpop.permute.xlu0 %572
        %574 = vrot.lane.b32.xlu0 %v562, 127
        %v575 = vpop.permute.xlu0 %574
        %v576 = vsel %vm400, %v573, %v575
        %v577 = vsel %vm400, %v575, %v573
        %v578 = vmul.f32 %v576, %v372
        %v579 = vmul.f32 %v577, %v376
        %v580 = vcombine.low %v560, %v560
        %v582 = vsel %vm407, %v570, %v580
        %v583 = vsel %vm407, %v571, %v560
        %v585 = vsel %vm407, %v578, 0
        %v588 = vsel %vm407, %v579, 0
        %590 = vmatprep.subr.mxu0 0.0
        %591 = vmatpush1.msra.mxu0 0.0
        %592 = vmatprep.subr.mxu0 0.0
        %593 = vmatpush1.msra.mxu0 0.0
        %594 = vmatprep.subr.mxu0 0.0
        %595 = vmatpush1.msra.mxu0 0.0
        %596 = vmatprep.subr.mxu0 0.0
        %597 = vmatpush1.msra.mxu0 0.0
        %598 = vmatprep.subr.mxu0 0.0
        %599 = vmatpush1.msra.mxu0 0.0
        %600 = vmatprep.subr.mxu0 0.0
        %601 = vmatpush1.msra.mxu0 0.0
        %602 = vmatprep.subr.mxu0 0.0
        %603 = vmatpush1.msra.mxu0 0.0
        %604 = vmatprep.subr.mxu0 0.0
        %605 = vmatpush1.msra.mxu0 0.0
        %606 = vmatprep.subr.mxu0 0.0
        %607 = vmatpush1.msra.mxu0 0.0
        %608 = vmatprep.subr.mxu0 0.0
        %609 = vmatpush1.msra.mxu0 0.0
        %610 = vmatprep.subr.mxu0 0.0
        %611 = vmatpush1.msra.mxu0 0.0
        %612 = vmatprep.subr.mxu0 0.0
        %613 = vmatpush1.msra.mxu0 0.0
        %614 = vmatprep.subr.mxu0 0.0
        %615 = vmatpush1.msra.mxu0 0.0
        %616 = vmatprep.subr.mxu0 0.0
        %617 = vmatpush1.msra.mxu0 0.0
        %618 = vmatprep.subr.mxu0 %v588
        %619 = vmatpush1.msra.mxu0 %v585
        %620 = vmatprep.subr.mxu0 %v583
        %621 = vmatpush1.msra.mxu0 %v582
        %622 = vmatprep.subr.mxu0 0.0
        %623 = vmatpush2.msra.mxu0 0.0
        %624 = vmatprep.subr.mxu0 0.0
        %625 = vmatpush2.msra.mxu0 0.0
        %626 = vmatprep.subr.mxu0 0.0
        %627 = vmatpush2.msra.mxu0 0.0
        %628 = vmatprep.subr.mxu0 0.0
        %629 = vmatpush2.msra.mxu0 0.0
        %630 = vmatprep.subr.mxu0 0.0
        %631 = vmatpush2.msra.mxu0 0.0
        %632 = vmatprep.subr.mxu0 0.0
        %633 = vmatpush2.msra.mxu0 0.0
        %634 = vmatprep.subr.mxu0 0.0
        %635 = vmatpush2.msra.mxu0 0.0
        %636 = vmatprep.subr.mxu0 0.0
        %637 = vmatpush2.msra.mxu0 0.0
        %638 = vmatprep.subr.mxu0 0.0
        %639 = vmatpush2.msra.mxu0 0.0
        %640 = vmatprep.subr.mxu0 0.0
        %641 = vmatpush2.msra.mxu0 0.0
        %642 = vmatprep.subr.mxu0 0.0
        %643 = vmatpush2.msra.mxu0 0.0
        %644 = vmatprep.subr.mxu0 0.0
        %645 = vmatpush2.msra.mxu0 0.0
        %646 = vmatprep.subr.mxu0 0.0
        %647 = vmatpush2.msra.mxu0 0.0
        %648 = vmatprep.subr.mxu0 0.0
        %649 = vmatpush2.msra.mxu0 0.0
        %650 = vmatprep.subr.mxu0 0.0
        %651 = vmatpush2.msra.mxu0 0.0
        %652 = vmatprep.subr.mxu0 0.0
        %653 = vmatpush2.msra.mxu0 0.0
        %654 = vmatprep.mubr.f32.mxu0 0.0
        %655 = vmatmul.mubr.f32.gmra.mxu0 %v412
        %v656 = vpop.f32.mrf.mxu0
        %v657 = vadd.f32 %v332, %v656
        %v658 = vpop.f32.mrf.mxu0
        %v659 = vadd.f32 %v332, %v658
        %660 = vmatprep.mubr.f32.mxu0 0.0
        %661 = vmatmul.mubr.f32.gmra.mxu0 %v415
        %v662 = vpop.f32.mrf.mxu0
        %v663 = vadd.f32 %v337, %v662
        %v664 = vpop.f32.mrf.mxu0
        %v665 = vadd.f32 %v337, %v664
        %666 = vdwg.mxu0
        %v667 = vxor.u32 %v657, 2147483648
        %v668 = vxor.u32 %v659, 2147483648
        %v669 = vmul.f32 %v667, 1.442695
        %v670 = vpow.pop %v669
        %v671 = vmul.f32 %v668, 1.442695
        %v672 = vpow.pop %v671
        %v673 = vadd.f32 %v670, 1.0
        %v674 = vadd.f32 %v672, 1.0
        %v675 = vrcp.pop %v673
        %v676 = vmul.f32 1.0, %v675
        %v677 = vrcp.pop %v674
        %v678 = vmul.f32 1.0, %v677
        %v679 = vtanh.pop %v663
        %v680 = vtanh.pop %v665
        %v681 = vmul.f32 %v676, %v679
        %v682 = vmul.f32 %v678, %v680
        %v683 = vadd.f32 %v681, %v682
        %684 = vadd.xlane.f32.xlu0 %v683
        %v685 = vpop.xlane.xlu0 %684
        %v686 = vrot.slane %v685, 4
        %v687 = vadd.f32 %v685, %v686
        %v688 = vrot.slane %v687, 2
        %v689 = vadd.f32 %v687, %v688
        %v690 = vrot.slane %v689, 1
        %v691 = vadd.f32 %v689, %v690
        %s692 = vtos %v691
        %s693 = smul.f32 %s692, 0.00048828125
        %v694 = vmul.f32 %v681, %v681
        %v695 = vmul.f32 %v682, %v682
        %v696 = vadd.f32 %v694, %v695
        %697 = vadd.xlane.f32.xlu0 %v696
        %v698 = vpop.xlane.xlu0 %697
        %v699 = vrot.slane %v698, 4
        %v700 = vadd.f32 %v698, %v699
        %v701 = vrot.slane %v700, 2
        %v702 = vadd.f32 %v700, %v701
        %v703 = vrot.slane %v702, 1
        %v704 = vadd.f32 %v702, %v703
        %s705 = vtos %v704
        %s706 = smul.f32 %s705, 0.00048828125
        %s707 = smul.f32 %s693, %s693
        %s708 = ssub.f32 %s706, %s707
        %s709 = smax.f32 %s708, 0.0
        %v710 = vstv %s693
        %v711 = vsub.f32 %v681, %v710
        %v712 = vsub.f32 %v682, %v710
        %s713 = sadd.f32 %s709, 1e-05
        %v714 = vstv %s713
        %v715 = vrsqrt.pop %v714
        %s716 = vtos %v715
        %v717 = vstv %s716
        %v718 = vmul.f32 %v711, %v717
        %v719 = vmul.f32 %v712, %v717
        %v720 = vmul.f32 %v718, %v377
        %v721 = vmul.f32 %v719, %v378
        %v722 = vadd.f32 %v720, %v379
        %v723 = vadd.f32 %v721, %v380
        %s724 = scalar_lea.vmem %s322, 16 [#allocation8]
        %725 = vst [vmem:[%s724] sm:$0xff] %v722
        %726 = vst [vmem:[%s724 + $0x8] sm:$0xff] %v723
        %s727 = sand.u32 %s185, 1
        %s728 = scalar_lea.sflag [#allocation4], %s727
        %s729 = sand.u32 %s185, 1
        %s730 = smul.addr %s729, 32
        %s731 = scalar_lea.vmem [#allocation8], %s730
        // Predicated region
        $region61: #{tpu_custom_call.1} parent=47 // pred_check
          %p732 = pneg %p195
        $region62: #{tpu_custom_call.1} parent=47 // pred_check_branch
          %734 = sbr.rel (%p732) target = $region64
        $region63: #{tpu_custom_call.1} parent=47 // pred_region
          %s735 = smul.u32 2, %s25
          %s737 = ssub.s32 512, 512
          %738 = vsyncadd %s728, %s737
          %s739 = smul.addr %s735, 2
          %s740 = smul.addr %s739, 128
          %s741 = scalar_lea.hbm %s7, %s740
          %s742 = sshll.u32 %s731, 4
          %s743 = int_to_ptr.vmem [resolvable:$true] %s742
          %748 = dma.vmem_to_hbm [thread:$0]  %s743, 512, %s741, %s728, 256, 256, 16
        $region64: #{tpu_custom_call.1} parent=47 // pred_fallthru
          _
      $region48: #{tpu_custom_call.1} parent=5 // pred_fallthru
        _
      %p749 = scmp.le.s32.totalorder 2, %s20
      // Predicated region
      $region65: #{tpu_custom_call.1} parent=5 // pred_check
        %p750 = pneg %p749
      $region66: #{tpu_custom_call.1} parent=5 // pred_check_branch
        %752 = sbr.rel (%p750) target = $region68
      $region67: #{tpu_custom_call.1} parent=5 // pred_region
        %s753 = ssub.s32 %s20, 2
        // Predicated region
        $region69: #{tpu_custom_call.1} parent=67 // pred_check
          %p754 = pneg %p201
        $region70: #{tpu_custom_call.1} parent=67 // pred_check_branch
          %756 = sbr.rel (%p754) target = $region72
        $region71: #{tpu_custom_call.1} parent=67 // pred_region
          %s757 = sand.u32 %s186, 1
          %s758 = scalar_lea.sflag [#allocation4], %s757
          %s759 = sand.u32 %s186, 1
          %s760 = smul.addr %s759, 32
          %s761 = scalar_lea.vmem [#allocation8], %s760
          %762 = dma.done %s758, 512
        $region72: #{tpu_custom_call.1} parent=67 // pred_fallthru
          _
      $region68: #{tpu_custom_call.1} parent=5 // pred_fallthru
        _
    $region6: #{tpu_custom_call.1} parent=1 // loop_footer
      %s24 = sadd.s32 1, %s20
    $region7: #{tpu_custom_call.1} parent=1 // loop_footer_branch
      %19 = sbr.rel target = $region3
    $region8: #{tpu_custom_call.1} parent=1 // loop_exit
      _
    %763 = vsyncpa [#allocation3], 1
    %s764 = scalar_lea.sflag [#allocation3], 1
    %765 = vsyncpa %s764, 1
    %766 = vsyncpa [#allocation6], 1
    %767 = vsyncpa [#allocation4], 1
    %s768 = scalar_lea.sflag [#allocation4], 1
    %769 = vsyncpa %s768, 1

// kernel: tpu_custom_call.1
$region0: #{tpu_custom_call.1}
  #allocation0 [shape = 'u32[]', space=smem, size = 0x4, offset = 0x4, fixed_abs, tag = 'smem constant byte address 0x4 - core index']
  #allocation1 [shape = 'u32[144,128]{1,0:T(1,128)}', space=vmem, size = 0x12000, scoped, tag = 'internal scratch']
  %s0 = inlined_call_operand.hbm [shape: f32[4,4,256], index: 0, kind: input, shape index: {}]
  %s1 = inlined_call_operand.vmem [shape: f32[16,12], index: 1, kind: input, shape index: {}]
  %s2 = inlined_call_operand.vmem [shape: f32[16,1], index: 2, kind: input, shape index: {}]
  %s3 = inlined_call_operand.vmem [shape: f32[2,256], index: 3, kind: input, shape index: {}]
  %s4 = inlined_call_operand.vmem [shape: f32[1,256], index: 4, kind: input, shape index: {}]
  %s5 = inlined_call_operand.hbm [shape: f32[8,256], index: 5, kind: input, shape index: {}]
  %s6 = inlined_call_operand.hbm [shape: f32[8,256], index: 6, kind: input, shape index: {}]
  %s7 = inlined_call_operand.hbm [shape: f32[4,8,256], index: 7, kind: output, shape index: {}]
  %s8 = sld [smem:[#allocation0]]
  $region73: #{tpu_custom_call.1} parent=0
    _
  %s10 = ssub.s32 1, %s8
  %s11 = scalar_select 0, %s10, %s8
  $region1: #{tpu_custom_call.1} parent=0
    #allocation2 [shape = 'u8[16384]{0}', space=vmem, size = 0x4000, scoped, tag = 'input window, operand 0']
    #allocation3 [shape = 's32[2]{0}', space=sflag, size = 0x8, scoped, tag = 'scoped memory for tpu_custom_call.1']
    #allocation4 [shape = 's32[2]{0}', space=sflag, size = 0x8, scoped, tag = 'scoped memory for tpu_custom_call.1']
    #allocation5 [shape = 'u8[8192]{0}', space=vmem, size = 0x2000, scoped, tag = 'input window, operand 5, single buffered']
    #allocation6 [shape = 's32[1]{0}', space=sflag, size = 0x4, scoped, tag = 'scoped memory for tpu_custom_call.1']
    #allocation7 [shape = 'u8[8192]{0}', space=vmem, size = 0x2000, scoped, tag = 'input window, operand 6, single buffered']
    #allocation8 [shape = 'u8[32768]{0}', space=vmem, size = 0x8000, scoped, tag = 'output window, operand 0']
    %12 = vsyncpa [#allocation3], 0
    %s13 = scalar_lea.sflag [#allocation3], 1
    %14 = vsyncpa %s13, 0
    %15 = vsyncpa [#allocation6], 0
    %16 = vsyncpa [#allocation4], 0
    %s17 = scalar_lea.sflag [#allocation4], 1
    %18 = vsyncpa %s17, 0
    loop: start=0, step=1, limit=4
    $region2: #{tpu_custom_call.1} parent=1 // loop_pre_header
      _
    $region3: #{tpu_custom_call.1} parent=1 // loop_header
      %s20 = sphi 0, %s24
      %p21 = scmp.ge.s32.totalorder %s20, 4
      %s30 = sphi 0, %s32
      %s33 = sphi 0, %s30
      %s34 = sphi 0, %s33
      %s50 = sphi 0, %s34
      %s54 = sphi 0, %s54
      %s56 = sphi 0, %s54
      %s57 = sphi 0, %s56
      %s71 = sphi 0, %s57
      %s75 = sphi 0, %s75
      %s77 = sphi 0, %s75
      %s78 = sphi 0, %s77
      %s92 = sphi 0, %s78
      %s96 = sphi 0, %s96
      %s98 = sphi 0, %s96
      %s99 = sphi 0, %s98
      %s113 = sphi 0, %s99
      %s117 = sphi 0, %s117
      %s119 = sphi 0, %s117
      %s120 = sphi 0, %s119
      %s134 = sphi 0, %s120
      %s138 = sphi 0, %s138
      %s140 = sphi 0, %s138
      %s141 = sphi 0, %s140
      %s155 = sphi 0, %s141
      %s159 = sphi 0, %s159
      %s161 = sphi 0, %s159
      %s162 = sphi 0, %s161
      %s176 = sphi 0, %s162
      %s182 = sphi 0, %s184
      %s185 = sphi 0, %s182
      %s186 = sphi 0, %s185
      %s202 = sphi 0, %s186
    $region4: #{tpu_custom_call.1} parent=1 // loop_header_branch
      %23 = sbr.rel (%p21) target = $region8
    $region5: #{tpu_custom_call.1} parent=1 // loop_body
      %s25 = ssub.s32 %s20, 1
      %s26 = ssub.s32 %s20, 2
      %s27 = sadd.s32 %s20, 1
      %s28 = ssub.s32 %s20, %s27
      %p29 = scmp.eq.s32.totalorder %s28, 0
      %s31 = sadd.s32 %s30, 1
      %s32 = scalar_select %p29, %s30, %s31
      %p35 = pneg %p29
      %p36 = scmp.eq.s32.totalorder %s20, 1
      %p37 = por %p35, %p36
      %p38 = scmp.ne.s32.totalorder %s30, %s33
      %p39 = scmp.eq.s32.totalorder %s20, 0
      %p40 = por %p38, %p39
      %p41 = scmp.ne.s32.totalorder %s30, %s33
      %p42 = scmp.eq.s32.totalorder %s25, 1
      %p43 = por %p41, %p42
      %p44 = scmp.ne.s32.totalorder %s33, %s34
      %p45 = scmp.eq.s32.totalorder %s25, 0
      %p46 = por %p44, %p45
      %p47 = scmp.ne.s32.totalorder %s33, %s34
      %p48 = scmp.eq.s32.totalorder %s26, 1
      %p49 = por %p47, %p48
      %p51 = scmp.ne.s32.totalorder %s34, %s50
      %p52 = scmp.eq.s32.totalorder %s26, 0
      %p53 = por %p51, %p52
      %s55 = sadd.s32 %s54, 1
      %p58 = scmp.eq.s32.totalorder %s20, 1
      %p59 = scmp.ne.s32.totalorder %s54, %s56
      %p60 = scmp.eq.s32.totalorder %s20, 0
      %p61 = por %p59, %p60
      %p62 = scmp.ne.s32.totalorder %s54, %s56
      %p63 = scmp.eq.s32.totalorder %s25, 1
      %p64 = por %p62, %p63
      %p65 = scmp.ne.s32.totalorder %s56, %s57
      %p66 = scmp.eq.s32.totalorder %s25, 0
      %p67 = por %p65, %p66
      %p68 = scmp.ne.s32.totalorder %s56, %s57
      %p69 = scmp.eq.s32.totalorder %s26, 1
      %p70 = por %p68, %p69
      %p72 = scmp.ne.s32.totalorder %s57, %s71
      %p73 = scmp.eq.s32.totalorder %s26, 0
      %p74 = por %p72, %p73
      %s76 = sadd.s32 %s75, 1
      %p79 = scmp.eq.s32.totalorder %s20, 1
      %p80 = scmp.ne.s32.totalorder %s75, %s77
      %p81 = scmp.eq.s32.totalorder %s20, 0
      %p82 = por %p80, %p81
      %p83 = scmp.ne.s32.totalorder %s75, %s77
      %p84 = scmp.eq.s32.totalorder %s25, 1
      %p85 = por %p83, %p84
      %p86 = scmp.ne.s32.totalorder %s77, %s78
      %p87 = scmp.eq.s32.totalorder %s25, 0
      %p88 = por %p86, %p87
      %p89 = scmp.ne.s32.totalorder %s77, %s78
      %p90 = scmp.eq.s32.totalorder %s26, 1
      %p91 = por %p89, %p90
      %p93 = scmp.ne.s32.totalorder %s78, %s92
      %p94 = scmp.eq.s32.totalorder %s26, 0
      %p95 = por %p93, %p94
      %s97 = sadd.s32 %s96, 1
      %p100 = scmp.eq.s32.totalorder %s20, 1
      %p101 = scmp.ne.s32.totalorder %s96, %s98
      %p102 = scmp.eq.s32.totalorder %s20, 0
      %p103 = por %p101, %p102
      %p104 = scmp.ne.s32.totalorder %s96, %s98
      %p105 = scmp.eq.s32.totalorder %s25, 1
      %p106 = por %p104, %p105
      %p107 = scmp.ne.s32.totalorder %s98, %s99
      %p108 = scmp.eq.s32.totalorder %s25, 0
      %p109 = por %p107, %p108
      %p110 = scmp.ne.s32.totalorder %s98, %s99
      %p111 = scmp.eq.s32.totalorder %s26, 1
      %p112 = por %p110, %p111
      %p114 = scmp.ne.s32.totalorder %s99, %s113
      %p115 = scmp.eq.s32.totalorder %s26, 0
      %p116 = por %p114, %p115
      %s118 = sadd.s32 %s117, 1
      %p121 = scmp.eq.s32.totalorder %s20, 1
      %p122 = scmp.ne.s32.totalorder %s117, %s119
      %p123 = scmp.eq.s32.totalorder %s20, 0
      %p124 = por %p122, %p123
      %p125 = scmp.ne.s32.totalorder %s117, %s119
      %p126 = scmp.eq.s32.totalorder %s25, 1
      %p127 = por %p125, %p126
      %p128 = scmp.ne.s32.totalorder %s119, %s120
      %p129 = scmp.eq.s32.totalorder %s25, 0
      %p130 = por %p128, %p129
      %p131 = scmp.ne.s32.totalorder %s119, %s120
      %p132 = scmp.eq.s32.totalorder %s26, 1
      %p133 = por %p131, %p132
      %p135 = scmp.ne.s32.totalorder %s120, %s134
      %p136 = scmp.eq.s32.totalorder %s26, 0
      %p137 = por %p135, %p136
      %s139 = sadd.s32 %s138, 1
      %p142 = scmp.eq.s32.totalorder %s20, 1
      %p143 = scmp.ne.s32.totalorder %s138, %s140
      %p144 = scmp.eq.s32.totalorder %s20, 0
      %p145 = por %p143, %p144
      %p146 = scmp.ne.s32.totalorder %s138, %s140
      %p147 = scmp.eq.s32.totalorder %s25, 1
      %p148 = por %p146, %p147
      %p149 = scmp.ne.s32.totalorder %s140, %s141
      %p150 = scmp.eq.s32.totalorder %s25, 0
      %p151 = por %p149, %p150
      %p152 = scmp.ne.s32.totalorder %s140, %s141
      %p153 = scmp.eq.s32.totalorder %s26, 1
      %p154 = por %p152, %p153
      %p156 = scmp.ne.s32.totalorder %s141, %s155
      %p157 = scmp.eq.s32.totalorder %s26, 0
      %p158 = por %p156, %p157
      %s160 = sadd.s32 %s159, 1
      %p163 = scmp.eq.s32.totalorder %s20, 1
      %p164 = scmp.ne.s32.totalorder %s159, %s161
      %p165 = scmp.eq.s32.totalorder %s20, 0
      %p166 = por %p164, %p165
      %p167 = scmp.ne.s32.totalorder %s159, %s161
      %p168 = scmp.eq.s32.totalorder %s25, 1
      %p169 = por %p167, %p168
      %p170 = scmp.ne.s32.totalorder %s161, %s162
      %p171 = scmp.eq.s32.totalorder %s25, 0
      %p172 = por %p170, %p171
      %p173 = scmp.ne.s32.totalorder %s161, %s162
      %p174 = scmp.eq.s32.totalorder %s26, 1
      %p175 = por %p173, %p174
      %p177 = scmp.ne.s32.totalorder %s162, %s176
      %p178 = scmp.eq.s32.totalorder %s26, 0
      %p179 = por %p177, %p178
      %s180 = ssub.s32 %s20, %s27
      %p181 = scmp.eq.s32.totalorder %s180, 0
      %s183 = sadd.s32 %s182, 1
      %s184 = scalar_select %p181, %s182, %s183
      %p187 = pneg %p181
      %p188 = scmp.eq.s32.totalorder %s20, 1
      %p189 = por %p187, %p188
      %p190 = scmp.ne.s32.totalorder %s182, %s185
      %p191 = scmp.eq.s32.totalorder %s20, 0
      %p192 = por %p190, %p191
      %p193 = scmp.ne.s32.totalorder %s182, %s185
      %p194 = scmp.eq.s32.totalorder %s25, 1
      %p195 = por %p193, %p194
      %p196 = scmp.ne.s32.totalorder %s185, %s186
      %p197 = scmp.eq.s32.totalorder %s25, 0
      %p198 = por %p196, %p197
      %p199 = scmp.ne.s32.totalorder %s185, %s186
      %p200 = scmp.eq.s32.totalorder %s26, 1
      %p201 = por %p199, %p200
      %p203 = scmp.ne.s32.totalorder %s186, %s202
      %p204 = scmp.eq.s32.totalorder %s26, 0
      %p205 = por %p203, %p204
      %p206 = scmp.le.s32.totalorder 1, %s20
      %p207 = scmp.lt.s32.totalorder %s20, 3
      %p208 = pnand %p206, %p207
      %p209 = pneg %p208
      // Predicated region
      $region9: #{tpu_custom_call.1} parent=5 // pred_check
        _
      $region10: #{tpu_custom_call.1} parent=5 // pred_check_branch
        %211 = sbr.rel (%p208) target = $region12
      $region11: #{tpu_custom_call.1} parent=5 // pred_region
        %s212 = ssub.s32 %s20, 1
        // Predicated region
        $region13: #{tpu_custom_call.1} parent=11 // pred_check
          %p213 = pneg %p67
        $region14: #{tpu_custom_call.1} parent=11 // pred_check_branch
          %215 = sbr.rel (%p213) target = $region16
        $region15: #{tpu_custom_call.1} parent=11 // pred_region
          _
        $region16: #{tpu_custom_call.1} parent=11 // pred_fallthru
          _
        // Predicated region
        $region17: #{tpu_custom_call.1} parent=11 // pred_check
          %p216 = pneg %p88
        $region18: #{tpu_custom_call.1} parent=11 // pred_check_branch
          %218 = sbr.rel (%p216) target = $region20
        $region19: #{tpu_custom_call.1} parent=11 // pred_region
          _
        $region20: #{tpu_custom_call.1} parent=11 // pred_fallthru
          _
        // Predicated region
        $region21: #{tpu_custom_call.1} parent=11 // pred_check
          %p219 = pneg %p109
        $region22: #{tpu_custom_call.1} parent=11 // pred_check_branch
          %221 = sbr.rel (%p219) target = $region24
        $region23: #{tpu_custom_call.1} parent=11 // pred_region
          _
        $region24: #{tpu_custom_call.1} parent=11 // pred_fallthru
          _
        // Predicated region
        $region25: #{tpu_custom_call.1} parent=11 // pred_check
          %p222 = pneg %p130
        $region26: #{tpu_custom_call.1} parent=11 // pred_check_branch
          %224 = sbr.rel (%p222) target = $region28
        $region27: #{tpu_custom_call.1} parent=11 // pred_region
          _
        $region28: #{tpu_custom_call.1} parent=11 // pred_fallthru
          _
        // Predicated region
        $region29: #{tpu_custom_call.1} parent=11 // pred_check
          %p225 = pneg %p151
        $region30: #{tpu_custom_call.1} parent=11 // pred_check_branch
          %227 = sbr.rel (%p225) target = $region32
        $region31: #{tpu_custom_call.1} parent=11 // pred_region
          %s229 = ssub.s32 256, 256
          %230 = vsyncadd [#allocation6], %s229
          %s232 = sshll.u32 [#allocation5], 4
          %s233 = int_to_ptr.vmem [resolvable:$true] %s232
          %235 = dma.hbm_to_vmem [thread:$0]  %s5, 256, %s233, [#allocation6]
        $region32: #{tpu_custom_call.1} parent=11 // pred_fallthru
          _
        // Predicated region
        $region33: #{tpu_custom_call.1} parent=11 // pred_check
          %p236 = pneg %p172
        $region34: #{tpu_custom_call.1} parent=11 // pred_check_branch
          %238 = sbr.rel (%p236) target = $region36
        $region35: #{tpu_custom_call.1} parent=11 // pred_region
          %s240 = ssub.s32 256, 256
          %241 = vsyncadd [#allocation6], %s240
          %s243 = sshll.u32 [#allocation7], 4
          %s244 = int_to_ptr.vmem [resolvable:$true] %s243
          %246 = dma.hbm_to_vmem [thread:$0]  %s6, 256, %s244, [#allocation6]
        $region36: #{tpu_custom_call.1} parent=11 // pred_fallthru
          _
      $region12: #{tpu_custom_call.1} parent=5 // pred_fallthru
        _
      %p247 = scmp.lt.s32.totalorder %s20, 2
      // Predicated region
      $region37: #{tpu_custom_call.1} parent=5 // pred_check
        %p248 = pneg %p247
      $region38: #{tpu_custom_call.1} parent=5 // pred_check_branch
        %250 = sbr.rel (%p248) target = $region40
      $region39: #{tpu_custom_call.1} parent=5 // pred_region
        // Predicated region
        $region41: #{tpu_custom_call.1} parent=39 // pred_check
          %p251 = pneg %p40
        $region42: #{tpu_custom_call.1} parent=39 // pred_check_branch
          %253 = sbr.rel (%p251) target = $region44
        $region43: #{tpu_custom_call.1} parent=39 // pred_region
          %s254 = sand.u32 %s30, 1
          %s255 = scalar_lea.sflag [#allocation3], %s254
          %s256 = sand.u32 %s30, 1
          %s257 = smul.addr %s256, 16
          %s258 = scalar_lea.vmem [#allocation2], %s257
          %s259 = smul.u32 2, %s20
          %s261 = ssub.s32 256, 256
          %262 = vsyncadd %s255, %s261
          %s263 = smul.addr %s259, 2
          %s264 = smul.addr %s263, 64
          %s265 = scalar_lea.hbm %s0, %s264
          %s266 = sshll.u32 %s258, 4
          %s267 = int_to_ptr.vmem [resolvable:$true] %s266
          %272 = dma.hbm_to_vmem [thread:$0]  %s265, 256, %s267, %s255, 128, 128, 8
        $region44: #{tpu_custom_call.1} parent=39 // pred_fallthru
          _
      $region40: #{tpu_custom_call.1} parent=5 // pred_fallthru
        _
      %p273 = scmp.le.s32.totalorder 1, %s20
      %p274 = scmp.lt.s32.totalorder %s20, 3
      %p275 = pnand %p273, %p274
      %p276 = pneg %p275
      // Predicated region
      $region45: #{tpu_custom_call.1} parent=5 // pred_check
        _
      $region46: #{tpu_custom_call.1} parent=5 // pred_check_branch
        %278 = sbr.rel (%p275) target = $region48
      $region47: #{tpu_custom_call.1} parent=5 // pred_region
        %s279 = ssub.s32 %s20, 1
        %s280 = sand.u32 %s33, 1
        %s281 = scalar_lea.sflag [#allocation3], %s280
        %s282 = sand.u32 %s33, 1
        %s283 = smul.addr %s282, 16
        %s284 = scalar_lea.vmem [#allocation2], %s283
        // Predicated region
        $region49: #{tpu_custom_call.1} parent=47 // pred_check
          %p285 = pneg %p46
        $region50: #{tpu_custom_call.1} parent=47 // pred_check_branch
          %287 = sbr.rel (%p285) target = $region52
        $region51: #{tpu_custom_call.1} parent=47 // pred_region
          %288 = dma.done %s281, 256
        $region52: #{tpu_custom_call.1} parent=47 // pred_fallthru
          _
        // Predicated region
        $region53: #{tpu_custom_call.1} parent=47 // pred_check
          %p289 = pneg %p151
        $region54: #{tpu_custom_call.1} parent=47 // pred_check_branch
          %291 = sbr.rel (%p289) target = $region56
        $region55: #{tpu_custom_call.1} parent=47 // pred_region
          %292 = dma.done [#allocation6], 256
        $region56: #{tpu_custom_call.1} parent=47 // pred_fallthru
          _
        // Predicated region
        $region57: #{tpu_custom_call.1} parent=47 // pred_check
          %p293 = pneg %p172
        $region58: #{tpu_custom_call.1} parent=47 // pred_check_branch
          %295 = sbr.rel (%p293) target = $region60
        $region59: #{tpu_custom_call.1} parent=47 // pred_region
          %296 = dma.done [#allocation6], 256
        $region60: #{tpu_custom_call.1} parent=47 // pred_fallthru
          _
        %s297 = sand.u32 %s33, 1
        %s298 = scalar_lea.sflag [#allocation3], %s297
        %s299 = sand.u32 %s33, 1
        %s300 = smul.addr %s299, 16
        %s301 = scalar_lea.vmem [#allocation2], %s300
        %p302 = pneg %p46
        %p303 = pneg %p43
        %p304 = pneg %p67
        %p305 = pneg %p64
        %p306 = pneg %p88
        %p307 = pneg %p85
        %p308 = pneg %p109
        %p309 = pneg %p106
        %p310 = pneg %p130
        %p311 = pneg %p127
        %p312 = pneg %p151
        %p313 = pneg %p148
        %p314 = pneg %p172
        %p315 = pneg %p169
        %p316 = pneg %p198
        %p317 = pneg %p195
        %s318 = sand.u32 %s185, 1
        %s319 = scalar_lea.sflag [#allocation4], %s318
        %s320 = sand.u32 %s185, 1
        %s321 = smul.addr %s320, 32
        %s322 = scalar_lea.vmem [#allocation8], %s321
        %s323 = smul.u32 2, %s25
        %s324 = smul.u32 2, %s25
        %v325 = vld [vmem:[%s1] sm:$0xff]
        %v326 = vld [vmem:[%s1 + $0x8] sm:$0xff]
        %v327 = vld [vmem:[%s2] sm:$0xff]
        %v328 = vld [vmem:[%s2 + $0x8] sm:$0xff]
        %330 = vset.pattern.permute.xlu0 0
        %331 = vperm.xlu0 %330, %v327
        %v332 = vpop.permute.xlu0 %331
        %335 = vset.pattern.permute.xlu0 0
        %336 = vperm.xlu0 %335, %v328
        %v337 = vpop.permute.xlu0 %336
        %v339 = vld [vmem:[%s3] sm:$0xf]
        %v341 = vlaneseq
        %v342 = vshrl.u32 %v341, 7
        %v343 = vsub.s32 0, %v342
        %v344 = vrot.slane %v339, %v343
        %v345 = vlaneseq
        %v346 = vshrl.u32 %v345, 7
        %v347 = vsub.s32 2, %v346
        %v348 = vrot.slane %v339, %v347
        %v351 = vlaneseq
        %v352 = vshrl.u32 %v351, 7
        %v353 = vsub.s32 0, %v352
        %v354 = vrot.slane %v344, %v353
        %v355 = vlaneseq
        %v356 = vshrl.u32 %v355, 7
        %v357 = vsub.s32 0, %v356
        %v358 = vrot.slane %v348, %v357
        %v359 = vlaneseq
        %v360 = vshrl.u32 %v359, 7
        %v361 = vsub.s32 1, %v360
        %v362 = vrot.slane %v339, %v361
        %v363 = vlaneseq
        %v364 = vshrl.u32 %v363, 7
        %v365 = vsub.s32 3, %v364
        %v366 = vrot.slane %v339, %v365
        %v369 = vlaneseq
        %v370 = vshrl.u32 %v369, 7
        %v371 = vsub.s32 1, %v370
        %v372 = vrot.slane %v362, %v371
        %v373 = vlaneseq
        %v374 = vshrl.u32 %v373, 7
        %v375 = vsub.s32 1, %v374
        %v376 = vrot.slane %v366, %v375
        %v377 = vld [vmem:[#allocation5] sm:$0xff]
        %v378 = vld [vmem:[#allocation5 + $0x8] sm:$0xff]
        %v379 = vld [vmem:[#allocation7] sm:$0xff]
        %v380 = vld [vmem:[#allocation7 + $0x8] sm:$0xff]
        %v381 = vld [vmem:[%s284] sm:$0xff]
        %v383 = vcombine.high %v381, %v381
        %385 = vrot.lane.b32.xlu0 %v381, 1
        %v386 = vpop.permute.xlu0 %385
        %387 = vrot.lane.b32.xlu0 %v383, 1
        %v388 = vpop.permute.xlu0 %387
        %v389 = vlaneseq
        %v390 = vand.u32 %v389, 127
        %vm391 = vcmp.lt.s32.totalorder %v390, 1
        %v392 = vsel %vm391, %v386, %v388
        %v393 = vsel %vm391, %v388, %v386
        %v394 = vmul.f32 %v393, %v354
        %v395 = vmul.f32 %v392, %v358
        %396 = vrot.lane.b32.xlu0 %v381, 127
        %v397 = vpop.permute.xlu0 %396
        %398 = vrot.lane.b32.xlu0 %v383, 127
        %v399 = vpop.permute.xlu0 %398
        %vm400 = vcmp.lt.s32.totalorder %v390, 127
        %v401 = vsel %vm400, %v397, %v399
        %v402 = vsel %vm400, %v399, %v397
        %v403 = vmul.f32 %v401, %v372
        %v404 = vmul.f32 %v402, %v376
        %v405 = vcombine.low %v381, %v381
        %vm407 = vcmask 1043456
        %v408 = vsel %vm407, %v394, %v405
        %v409 = vsel %vm407, %v395, %v381
        %vm410 = vcmask 97280
        %v412 = vsel %vm410, %v325, 0
        %v415 = vsel %vm410, %v326, 0
        %v418 = vsel %vm407, %v403, 0
        %v421 = vsel %vm407, %v404, 0
        %423 = vmatprep.subr.mxu0 0.0
        %424 = vmatpush1.msra.mxu0 0.0
        %425 = vmatprep.subr.mxu0 0.0
        %426 = vmatpush1.msra.mxu0 0.0
        %427 = vmatprep.subr.mxu0 0.0
        %428 = vmatpush1.msra.mxu0 0.0
        %429 = vmatprep.subr.mxu0 0.0
        %430 = vmatpush1.msra.mxu0 0.0
        %431 = vmatprep.subr.mxu0 0.0
        %432 = vmatpush1.msra.mxu0 0.0
        %433 = vmatprep.subr.mxu0 0.0
        %434 = vmatpush1.msra.mxu0 0.0
        %435 = vmatprep.subr.mxu0 0.0
        %436 = vmatpush1.msra.mxu0 0.0
        %437 = vmatprep.subr.mxu0 0.0
        %438 = vmatpush1.msra.mxu0 0.0
        %439 = vmatprep.subr.mxu0 0.0
        %440 = vmatpush1.msra.mxu0 0.0
        %441 = vmatprep.subr.mxu0 0.0
        %442 = vmatpush1.msra.mxu0 0.0
        %443 = vmatprep.subr.mxu0 0.0
        %444 = vmatpush1.msra.mxu0 0.0
        %445 = vmatprep.subr.mxu0 0.0
        %446 = vmatpush1.msra.mxu0 0.0
        %447 = vmatprep.subr.mxu0 0.0
        %448 = vmatpush1.msra.mxu0 0.0
        %449 = vmatprep.subr.mxu0 0.0
        %450 = vmatpush1.msra.mxu0 0.0
        %451 = vmatprep.subr.mxu0 %v421
        %452 = vmatpush1.msra.mxu0 %v418
        %453 = vmatprep.subr.mxu0 %v409
        %454 = vmatpush1.msra.mxu0 %v408
        %455 = vmatprep.subr.mxu0 0.0
        %456 = vmatpush2.msra.mxu0 0.0
        %457 = vmatprep.subr.mxu0 0.0
        %458 = vmatpush2.msra.mxu0 0.0
        %459 = vmatprep.subr.mxu0 0.0
        %460 = vmatpush2.msra.mxu0 0.0
        %461 = vmatprep.subr.mxu0 0.0
        %462 = vmatpush2.msra.mxu0 0.0
        %463 = vmatprep.subr.mxu0 0.0
        %464 = vmatpush2.msra.mxu0 0.0
        %465 = vmatprep.subr.mxu0 0.0
        %466 = vmatpush2.msra.mxu0 0.0
        %467 = vmatprep.subr.mxu0 0.0
        %468 = vmatpush2.msra.mxu0 0.0
        %469 = vmatprep.subr.mxu0 0.0
        %470 = vmatpush2.msra.mxu0 0.0
        %471 = vmatprep.subr.mxu0 0.0
        %472 = vmatpush2.msra.mxu0 0.0
        %473 = vmatprep.subr.mxu0 0.0
        %474 = vmatpush2.msra.mxu0 0.0
        %475 = vmatprep.subr.mxu0 0.0
        %476 = vmatpush2.msra.mxu0 0.0
        %477 = vmatprep.subr.mxu0 0.0
        %478 = vmatpush2.msra.mxu0 0.0
        %479 = vmatprep.subr.mxu0 0.0
        %480 = vmatpush2.msra.mxu0 0.0
        %481 = vmatprep.subr.mxu0 0.0
        %482 = vmatpush2.msra.mxu0 0.0
        %483 = vmatprep.subr.mxu0 0.0
        %484 = vmatpush2.msra.mxu0 0.0
        %485 = vmatprep.subr.mxu0 0.0
        %486 = vmatpush2.msra.mxu0 0.0
        %487 = vmatprep.mubr.f32.mxu0 0.0
        %488 = vmatmul.mubr.f32.gmra.mxu0 %v412
        %v489 = vpop.f32.mrf.mxu0
        %v490 = vadd.f32 %v332, %v489
        %v491 = vpop.f32.mrf.mxu0
        %v492 = vadd.f32 %v332, %v491
        %493 = vmatprep.mubr.f32.mxu0 0.0
        %494 = vmatmul.mubr.f32.gmra.mxu0 %v415
        %v495 = vpop.f32.mrf.mxu0
        %v496 = vadd.f32 %v337, %v495
        %v497 = vpop.f32.mrf.mxu0
        %v498 = vadd.f32 %v337, %v497
        %499 = vdwg.mxu0
        %v500 = vxor.u32 %v490, 2147483648
        %v501 = vxor.u32 %v492, 2147483648
        %v502 = vmul.f32 %v500, 1.442695
        %v503 = vpow.pop %v502
        %v504 = vmul.f32 %v501, 1.442695
        %v505 = vpow.pop %v504
        %v506 = vadd.f32 %v503, 1.0
        %v507 = vadd.f32 %v505, 1.0
        %v508 = vrcp.pop %v506
        %v509 = vmul.f32 1.0, %v508
        %v510 = vrcp.pop %v507
        %v511 = vmul.f32 1.0, %v510
        %v512 = vtanh.pop %v496
        %v513 = vtanh.pop %v498
        %v514 = vmul.f32 %v509, %v512
        %v515 = vmul.f32 %v511, %v513
        %v516 = vadd.f32 %v514, %v515
        %517 = vadd.xlane.f32.xlu0 %v516
        %v518 = vpop.xlane.xlu0 %517
        %v519 = vrot.slane %v518, 4
        %v520 = vadd.f32 %v518, %v519
        %v521 = vrot.slane %v520, 2
        %v522 = vadd.f32 %v520, %v521
        %v523 = vrot.slane %v522, 1
        %v524 = vadd.f32 %v522, %v523
        %s525 = vtos %v524
        %s526 = smul.f32 %s525, 0.00048828125
        %v527 = vmul.f32 %v514, %v514
        %v528 = vmul.f32 %v515, %v515
        %v529 = vadd.f32 %v527, %v528
        %530 = vadd.xlane.f32.xlu0 %v529
        %v531 = vpop.xlane.xlu0 %530
        %v532 = vrot.slane %v531, 4
        %v533 = vadd.f32 %v531, %v532
        %v534 = vrot.slane %v533, 2
        %v535 = vadd.f32 %v533, %v534
        %v536 = vrot.slane %v535, 1
        %v537 = vadd.f32 %v535, %v536
        %s538 = vtos %v537
        %s539 = smul.f32 %s538, 0.00048828125
        %s540 = smul.f32 %s526, %s526
        %s541 = ssub.f32 %s539, %s540
        %s542 = smax.f32 %s541, 0.0
        %v543 = vstv %s526
        %v544 = vsub.f32 %v514, %v543
        %v545 = vsub.f32 %v515, %v543
        %s546 = sadd.f32 %s542, 1e-05
        %v547 = vstv %s546
        %v548 = vrsqrt.pop %v547
        %s549 = vtos %v548
        %v550 = vstv %s549
        %v551 = vmul.f32 %v544, %v550
        %v552 = vmul.f32 %v545, %v550
        %v553 = vmul.f32 %v551, %v377
        %v554 = vmul.f32 %v552, %v378
        %v555 = vadd.f32 %v553, %v379
        %v556 = vadd.f32 %v554, %v380
        %557 = vst [vmem:[%s322] sm:$0xff] %v555
        %558 = vst [vmem:[%s322 + $0x8] sm:$0xff] %v556
        %s559 = scalar_lea.vmem %s284, 8 [#allocation2]
        %v560 = vld [vmem:[%s559] sm:$0xff]
        %v562 = vcombine.high %v560, %v560
        %564 = vrot.lane.b32.xlu0 %v560, 1
        %v565 = vpop.permute.xlu0 %564
        %566 = vrot.lane.b32.xlu0 %v562, 1
        %v567 = vpop.permute.xlu0 %566
        %v568 = vsel %vm391, %v565, %v567
        %v569 = vsel %vm391, %v567, %v565
        %v570 = vmul.f32 %v569, %v354
        %v571 = vmul.f32 %v568, %v358
        %572 = vrot.lane.b32.xlu0 %v560, 127
        %v573 = vpop.permute.xlu0 %572
        %574 = vrot.lane.b32.xlu0 %v562, 127
        %v575 = vpop.permute.xlu0 %574
        %v576 = vsel %vm400, %v573, %v575
        %v577 = vsel %vm400, %v575, %v573
        %v578 = vmul.f32 %v576, %v372
        %v579 = vmul.f32 %v577, %v376
        %v580 = vcombine.low %v560, %v560
        %v582 = vsel %vm407, %v570, %v580
        %v583 = vsel %vm407, %v571, %v560
        %v585 = vsel %vm407, %v578, 0
        %v588 = vsel %vm407, %v579, 0
        %590 = vmatprep.subr.mxu0 0.0
        %591 = vmatpush1.msra.mxu0 0.0
        %592 = vmatprep.subr.mxu0 0.0
        %593 = vmatpush1.msra.mxu0 0.0
        %594 = vmatprep.subr.mxu0 0.0
        %595 = vmatpush1.msra.mxu0 0.0
        %596 = vmatprep.subr.mxu0 0.0
        %597 = vmatpush1.msra.mxu0 0.0
        %598 = vmatprep.subr.mxu0 0.0
        %599 = vmatpush1.msra.mxu0 0.0
        %600 = vmatprep.subr.mxu0 0.0
        %601 = vmatpush1.msra.mxu0 0.0
        %602 = vmatprep.subr.mxu0 0.0
        %603 = vmatpush1.msra.mxu0 0.0
        %604 = vmatprep.subr.mxu0 0.0
        %605 = vmatpush1.msra.mxu0 0.0
        %606 = vmatprep.subr.mxu0 0.0
        %607 = vmatpush1.msra.mxu0 0.0
        %608 = vmatprep.subr.mxu0 0.0
        %609 = vmatpush1.msra.mxu0 0.0
        %610 = vmatprep.subr.mxu0 0.0
        %611 = vmatpush1.msra.mxu0 0.0
        %612 = vmatprep.subr.mxu0 0.0
        %613 = vmatpush1.msra.mxu0 0.0
        %614 = vmatprep.subr.mxu0 0.0
        %615 = vmatpush1.msra.mxu0 0.0
        %616 = vmatprep.subr.mxu0 0.0
        %617 = vmatpush1.msra.mxu0 0.0
        %618 = vmatprep.subr.mxu0 %v588
        %619 = vmatpush1.msra.mxu0 %v585
        %620 = vmatprep.subr.mxu0 %v583
        %621 = vmatpush1.msra.mxu0 %v582
        %622 = vmatprep.subr.mxu0 0.0
        %623 = vmatpush2.msra.mxu0 0.0
        %624 = vmatprep.subr.mxu0 0.0
        %625 = vmatpush2.msra.mxu0 0.0
        %626 = vmatprep.subr.mxu0 0.0
        %627 = vmatpush2.msra.mxu0 0.0
        %628 = vmatprep.subr.mxu0 0.0
        %629 = vmatpush2.msra.mxu0 0.0
        %630 = vmatprep.subr.mxu0 0.0
        %631 = vmatpush2.msra.mxu0 0.0
        %632 = vmatprep.subr.mxu0 0.0
        %633 = vmatpush2.msra.mxu0 0.0
        %634 = vmatprep.subr.mxu0 0.0
        %635 = vmatpush2.msra.mxu0 0.0
        %636 = vmatprep.subr.mxu0 0.0
        %637 = vmatpush2.msra.mxu0 0.0
        %638 = vmatprep.subr.mxu0 0.0
        %639 = vmatpush2.msra.mxu0 0.0
        %640 = vmatprep.subr.mxu0 0.0
        %641 = vmatpush2.msra.mxu0 0.0
        %642 = vmatprep.subr.mxu0 0.0
        %643 = vmatpush2.msra.mxu0 0.0
        %644 = vmatprep.subr.mxu0 0.0
        %645 = vmatpush2.msra.mxu0 0.0
        %646 = vmatprep.subr.mxu0 0.0
        %647 = vmatpush2.msra.mxu0 0.0
        %648 = vmatprep.subr.mxu0 0.0
        %649 = vmatpush2.msra.mxu0 0.0
        %650 = vmatprep.subr.mxu0 0.0
        %651 = vmatpush2.msra.mxu0 0.0
        %652 = vmatprep.subr.mxu0 0.0
        %653 = vmatpush2.msra.mxu0 0.0
        %654 = vmatprep.mubr.f32.mxu0 0.0
        %655 = vmatmul.mubr.f32.gmra.mxu0 %v412
        %v656 = vpop.f32.mrf.mxu0
        %v657 = vadd.f32 %v332, %v656
        %v658 = vpop.f32.mrf.mxu0
        %v659 = vadd.f32 %v332, %v658
        %660 = vmatprep.mubr.f32.mxu0 0.0
        %661 = vmatmul.mubr.f32.gmra.mxu0 %v415
        %v662 = vpop.f32.mrf.mxu0
        %v663 = vadd.f32 %v337, %v662
        %v664 = vpop.f32.mrf.mxu0
        %v665 = vadd.f32 %v337, %v664
        %666 = vdwg.mxu0
        %v667 = vxor.u32 %v657, 2147483648
        %v668 = vxor.u32 %v659, 2147483648
        %v669 = vmul.f32 %v667, 1.442695
        %v670 = vpow.pop %v669
        %v671 = vmul.f32 %v668, 1.442695
        %v672 = vpow.pop %v671
        %v673 = vadd.f32 %v670, 1.0
        %v674 = vadd.f32 %v672, 1.0
        %v675 = vrcp.pop %v673
        %v676 = vmul.f32 1.0, %v675
        %v677 = vrcp.pop %v674
        %v678 = vmul.f32 1.0, %v677
        %v679 = vtanh.pop %v663
        %v680 = vtanh.pop %v665
        %v681 = vmul.f32 %v676, %v679
        %v682 = vmul.f32 %v678, %v680
        %v683 = vadd.f32 %v681, %v682
        %684 = vadd.xlane.f32.xlu0 %v683
        %v685 = vpop.xlane.xlu0 %684
        %v686 = vrot.slane %v685, 4
        %v687 = vadd.f32 %v685, %v686
        %v688 = vrot.slane %v687, 2
        %v689 = vadd.f32 %v687, %v688
        %v690 = vrot.slane %v689, 1
        %v691 = vadd.f32 %v689, %v690
        %s692 = vtos %v691
        %s693 = smul.f32 %s692, 0.00048828125
        %v694 = vmul.f32 %v681, %v681
        %v695 = vmul.f32 %v682, %v682
        %v696 = vadd.f32 %v694, %v695
        %697 = vadd.xlane.f32.xlu0 %v696
        %v698 = vpop.xlane.xlu0 %697
        %v699 = vrot.slane %v698, 4
        %v700 = vadd.f32 %v698, %v699
        %v701 = vrot.slane %v700, 2
        %v702 = vadd.f32 %v700, %v701
        %v703 = vrot.slane %v702, 1
        %v704 = vadd.f32 %v702, %v703
        %s705 = vtos %v704
        %s706 = smul.f32 %s705, 0.00048828125
        %s707 = smul.f32 %s693, %s693
        %s708 = ssub.f32 %s706, %s707
        %s709 = smax.f32 %s708, 0.0
        %v710 = vstv %s693
        %v711 = vsub.f32 %v681, %v710
        %v712 = vsub.f32 %v682, %v710
        %s713 = sadd.f32 %s709, 1e-05
        %v714 = vstv %s713
        %v715 = vrsqrt.pop %v714
        %s716 = vtos %v715
        %v717 = vstv %s716
        %v718 = vmul.f32 %v711, %v717
        %v719 = vmul.f32 %v712, %v717
        %v720 = vmul.f32 %v718, %v377
        %v721 = vmul.f32 %v719, %v378
        %v722 = vadd.f32 %v720, %v379
        %v723 = vadd.f32 %v721, %v380
        %s724 = scalar_lea.vmem %s322, 16 [#allocation8]
        %725 = vst [vmem:[%s724] sm:$0xff] %v722
        %726 = vst [vmem:[%s724 + $0x8] sm:$0xff] %v723
        %s727 = sand.u32 %s185, 1
        %s728 = scalar_lea.sflag [#allocation4], %s727
        %s729 = sand.u32 %s185, 1
        %s730 = smul.addr %s729, 32
        %s731 = scalar_lea.vmem [#allocation8], %s730
        // Predicated region
        $region61: #{tpu_custom_call.1} parent=47 // pred_check
          %p732 = pneg %p195
        $region62: #{tpu_custom_call.1} parent=47 // pred_check_branch
          %734 = sbr.rel (%p732) target = $region64
        $region63: #{tpu_custom_call.1} parent=47 // pred_region
          %s735 = smul.u32 2, %s25
          %s737 = ssub.s32 512, 512
          %738 = vsyncadd %s728, %s737
          %s739 = smul.addr %s735, 2
          %s740 = smul.addr %s739, 128
          %s741 = scalar_lea.hbm %s7, %s740
          %s742 = sshll.u32 %s731, 4
          %s743 = int_to_ptr.vmem [resolvable:$true] %s742
          %748 = dma.vmem_to_hbm [thread:$0]  %s743, 512, %s741, %s728, 256, 256, 16
        $region64: #{tpu_custom_call.1} parent=47 // pred_fallthru
          _
      $region48: #{tpu_custom_call.1} parent=5 // pred_fallthru
        _
      %p749 = scmp.le.s32.totalorder 2, %s20
      // Predicated region
      $region65: #{tpu_custom_call.1} parent=5 // pred_check
        %p750 = pneg %p749
      $region66: #{tpu_custom_call.1} parent=5 // pred_check_branch
        %752 = sbr.rel (%p750) target = $region68
      $region67: #{tpu_custom_call.1} parent=5 // pred_region
        %s753 = ssub.s32 %s20, 2
        // Predicated region
        $region69: #{tpu_custom_call.1} parent=67 // pred_check
          %p754 = pneg %p201
        $region70: #{tpu_custom_call.1} parent=67 // pred_check_branch
          %756 = sbr.rel (%p754) target = $region72
        $region71: #{tpu_custom_call.1} parent=67 // pred_region
          %s757 = sand.u32 %s186, 1
          %s758 = scalar_lea.sflag [#allocation4], %s757
          %s759 = sand.u32 %s186, 1
          %s760 = smul.addr %s759, 32
          %s761 = scalar_lea.vmem [#allocation8], %s760
          %762 = dma.done %s758, 512
        $region72: #{tpu_custom_call.1} parent=67 // pred_fallthru
          _
      $region68: #{tpu_custom_call.1} parent=5 // pred_fallthru
        _
    $region6: #{tpu_custom_call.1} parent=1 // loop_footer
      %s24 = sadd.s32 1, %s20
    $region7: #{tpu_custom_call.1} parent=1 // loop_footer_branch
      %19 = sbr.rel target = $region3
    $region8: #{tpu_custom_call.1} parent=1 // loop_exit
      _
    %763 = vsyncpa [#allocation3], 1
    %s764 = scalar_lea.sflag [#allocation3], 1
    %765 = vsyncpa %s764, 1
    %766 = vsyncpa [#allocation6], 1
    %767 = vsyncpa [#allocation4], 1
    %s768 = scalar_lea.sflag [#allocation4], 1
    %769 = vsyncpa %s768, 1

</llo_original>
